<compile_context>
chip_gen: v5e
topology: v5e:2x2
jax: 0.10.0
libtpu: 0.0.40
codegen_flags: <defaults>
</compile_context>

<pallas_src>
import numpy as np
import jax
import jax.numpy as jnp
from jax import lax
from jax.experimental import pallas as pl
from jax.experimental.pallas import tpu as pltpu


# ---------------------------------------------------------------------------
# Small helpers
# ---------------------------------------------------------------------------
def _round_up(x, m):
    return ((x + m - 1) // m) * m


def _pick_tile(n, max_tile=512):
    """Largest multiple-of-128 divisor of n that is <= max_tile (else full n)."""
    if n % 128 != 0:
        return n
    t = min(max_tile, n)
    t -= t % 128
    while n % t != 0:
        t -= 128
    return t


# ---------------------------------------------------------------------------
# Pallas kernels
# ---------------------------------------------------------------------------
def _graspable_kernel(x_ref, w1_ref, b1_ref, w2_ref, b2_ref,
                      grasp_ref, objmask_ref, gmask_ref):
    """graspable_head: relu(bn(conv1(x))) -> conv2 -> graspness + fused masks.

    x tile: (C, TN) bf16, points on lanes.  conv2 is zero-padded to 8 output
    rows (rows 0..1 = objectness logits, row 2 = graspness).
    """
    x = x_ref[0]                                                      # (C, TN) bf16
    h = jnp.dot(w1_ref[...], x, preferred_element_type=jnp.float32) + b1_ref[...]
    h = jnp.maximum(h, 0.0)                                           # f32
    g = jnp.dot(w2_ref[...], h.astype(jnp.bfloat16),
                preferred_element_type=jnp.float32) + b2_ref[...]     # (8, TN) f32
    graspness = g[2:3, :]                                             # (1, TN)
    obj_mask = g[1:2, :] > g[0:1, :]                                  # argmax(2-way) == 1
    gmask = jnp.logical_and(graspness > 0.1, obj_mask)                # fused threshold
    grasp_ref[0] = graspness
    objmask_ref[0] = obj_mask.astype(jnp.int32)
    gmask_ref[0] = gmask.astype(jnp.int32)


def _view_kernel(x_ref, w1_ref, b1_ref, w2_ref, b2_ref, w3t_ref, b3_ref,
                 vs_ref, score_ref, idx_ref):
    """relu(bn1(conv1)) -> relu(bn2(conv2)) -> conv3, emitting view_score in
    (M, V) layout plus fused max / first-occurrence argmax over views."""
    x = x_ref[0]                                                      # (C, TM) bf16
    h1 = jnp.maximum(
        jnp.dot(w1_ref[...], x, preferred_element_type=jnp.float32) + b1_ref[...], 0.0)
    h2 = jnp.maximum(
        jnp.dot(w2_ref[...], h1.astype(jnp.bfloat16),
                preferred_element_type=jnp.float32) + b2_ref[...], 0.0)   # (Vp, TM)
    # vs_t[m, v] = sum_k h2[k, m] * W3[v, k] + b3[v]  ==  (W3 @ h2)^T
    vs_t = lax.dot_general(h2.astype(jnp.bfloat16), w3t_ref[...],
                           (((0,), (0,)), ((), ())),
                           preferred_element_type=jnp.float32) + b3_ref[...]  # (TM, Vp)
    vs_ref[0] = vs_t
    mx = jnp.max(vs_t, axis=-1, keepdims=True)                        # (TM, 1)
    vp = vs_t.shape[-1]
    lane = lax.broadcasted_iota(jnp.int32, vs_t.shape, 1)
    # first-occurrence argmax over views (matches torch.max semantics)
    idx = jnp.min(jnp.where(vs_t == mx, lane, vp), axis=-1, keepdims=True)
    score_ref[0] = mx
    idx_ref[0] = idx


# ---------------------------------------------------------------------------
# Pallas wrappers
# ---------------------------------------------------------------------------
def graspable_head_pallas(seed_features, w1, b1, w2, b2):
    """seed_features (B,C,N) f32; w1/b1 = folded conv+bn; w2 (3,C), b2 (3,)."""
    B, C, N = seed_features.shape
    TN = _pick_tile(N)
    R = 8  # conv2 output rows padded 3 -> 8
    x = seed_features.astype(jnp.bfloat16)
    w1b = w1.astype(jnp.bfloat16)
    w2p = jnp.zeros((R, C), jnp.bfloat16).at[:3, :].set(w2.astype(jnp.bfloat16))
    b2p = jnp.zeros((R, 1), jnp.float32).at[:3, 0].set(b2)
    cost = pl.CostEstimate(
        flops=int(2 * B * N * C * (C + R)),
        transcendentals=0,
        bytes_accessed=int(B * C * N * 2 + C * C * 2 + R * C * 2 + 3 * B * N * 4))
    grasp, obj, gmask = pl.pallas_call(
        _graspable_kernel,
        out_shape=(jax.ShapeDtypeStruct((B, 1, N), jnp.float32),
                   jax.ShapeDtypeStruct((B, 1, N), jnp.int32),
                   jax.ShapeDtypeStruct((B, 1, N), jnp.int32)),
        grid=(B, N // TN),
        in_specs=[pl.BlockSpec((1, C, TN), lambda b, t: (b, 0, t)),
                  pl.BlockSpec((C, C), lambda b, t: (0, 0)),
                  pl.BlockSpec((C, 1), lambda b, t: (0, 0)),
                  pl.BlockSpec((R, C), lambda b, t: (0, 0)),
                  pl.BlockSpec((R, 1), lambda b, t: (0, 0))],
        out_specs=(pl.BlockSpec((1, 1, TN), lambda b, t: (b, 0, t)),
                   pl.BlockSpec((1, 1, TN), lambda b, t: (b, 0, t)),
                   pl.BlockSpec((1, 1, TN), lambda b, t: (b, 0, t))),
        compiler_params=pltpu.CompilerParams(
            dimension_semantics=("parallel", "parallel")),
        cost_estimate=cost,
    )(x, w1b, b1, w2p, b2p)
    return (grasp[:, 0, :],
            obj[:, 0, :].astype(bool),
            gmask[:, 0, :].astype(bool))


def view_head_pallas(feats, w1, b1, w2, b2, w3, b3, num_view):
    """feats (B,C,M) f32; w1/b1 and w2/b2 folded conv+bn; w3 (V,V), b3 (V,)."""
    B, C, M = feats.shape
    V = num_view
    Vp = max(_round_up(V, 8), 8)
    TM = _pick_tile(M)
    x = feats.astype(jnp.bfloat16)
    w1b = w1.astype(jnp.bfloat16)
    w2p = jnp.zeros((Vp, C), jnp.bfloat16).at[:V, :].set(w2.astype(jnp.bfloat16))
    b2p = jnp.zeros((Vp, 1), jnp.float32).at[:V, :].set(b2)
    w3p = jnp.zeros((Vp, Vp), jnp.float32).at[:V, :V].set(w3)
    w3t = jnp.transpose(w3p).astype(jnp.bfloat16)          # (Vp_k, Vp_out)
    b3p = jnp.full((1, Vp), -1e9, jnp.float32).at[0, :V].set(b3)   # pads never win max
    cost = pl.CostEstimate(
        flops=int(2 * B * M * (C * C + Vp * C + Vp * Vp)),
        transcendentals=0,
        bytes_accessed=int(B * C * M * 2 + B * M * Vp * 4 + 2 * B * M * 4
                           + (C * C + Vp * C + Vp * Vp) * 2))
    vs, score, idx = pl.pallas_call(
        _view_kernel,
        out_shape=(jax.ShapeDtypeStruct((B, M, Vp), jnp.float32),
                   jax.ShapeDtypeStruct((B, M, 1), jnp.float32),
                   jax.ShapeDtypeStruct((B, M, 1), jnp.int32)),
        grid=(B, M // TM),
        in_specs=[pl.BlockSpec((1, C, TM), lambda b, t: (b, 0, t)),
                  pl.BlockSpec((C, C), lambda b, t: (0, 0)),
                  pl.BlockSpec((C, 1), lambda b, t: (0, 0)),
                  pl.BlockSpec((Vp, C), lambda b, t: (0, 0)),
                  pl.BlockSpec((Vp, 1), lambda b, t: (0, 0)),
                  pl.BlockSpec((Vp, Vp), lambda b, t: (0, 0)),
                  pl.BlockSpec((1, Vp), lambda b, t: (0, 0))],
        out_specs=(pl.BlockSpec((1, TM, Vp), lambda b, t: (b, t, 0)),
                   pl.BlockSpec((1, TM, 1), lambda b, t: (b, t, 0)),
                   pl.BlockSpec((1, TM, 1), lambda b, t: (b, t, 0))),
        compiler_params=pltpu.CompilerParams(
            dimension_semantics=("parallel", "parallel")),
        cost_estimate=cost,
    )(x, w1b, b1, w2p, b2p, w3t, b3p)
    view_score = vs[..., :V] if Vp != V else vs            # (B, M, V)
    return view_score, score[..., 0], idx[..., 0]


# ---------------------------------------------------------------------------
# Plain-JAX glue (FPS, gathers, grasp-view templates, rotations)
# ---------------------------------------------------------------------------
def fold_bn(W, b, gamma, beta, mean, var, eps=1e-5):
    """Fold eval-mode BatchNorm1d into a preceding 1x1 conv."""
    scale = gamma / jnp.sqrt(var + eps)
    Wf = W * scale[:, None]
    bf = scale * (b - mean) + beta
    return Wf, bf[:, None]


def masked_fps_single(xyz, mask, nsample):
    """Furthest point sampling restricted to masked points; returns ORIGINAL indices."""
    # TODO(synk): when fewer than nsample points are masked, the CUDA FPS behavior on
    #             the smaller set is approximated here by allowing index repeats.
    big = 1e10
    dist0 = jnp.where(mask, big, -1.0)
    first = jnp.argmax(mask).astype(jnp.int32)            # first masked point
    idxs0 = jnp.zeros((nsample,), jnp.int32).at[0].set(first)

    def body(i, carry):
        dist, idxs = carry
        last = idxs[i]
        d = jnp.sum((xyz - xyz[last]) ** 2, axis=-1)
        dist = jnp.minimum(dist, jnp.where(mask, d, -1.0))
        nxt = jnp.argmax(dist).astype(jnp.int32)
        idxs = idxs.at[i + 1].set(nxt)
        return dist, idxs

    _, idxs = jax.lax.fori_loop(0, nsample - 1, body, (dist0, idxs0))
    return idxs


def generate_grasp_views(num_view, phi=(np.sqrt(5) - 1) / 2, r=1.0):
    i = np.arange(num_view)
    zs = (2 * i + 1) / num_view - 1
    xs = np.sqrt(np.maximum(1 - zs ** 2, 0.0)) * np.cos(2 * i * np.pi * phi)
    ys = np.sqrt(np.maximum(1 - zs ** 2, 0.0)) * np.sin(2 * i * np.pi * phi)
    return jnp.asarray(r * np.stack([xs, ys, zs], axis=1), dtype=jnp.float32)


def batch_viewpoint_params_to_matrix(batch_towards, batch_angle):
    axis_x = batch_towards
    zeros = jnp.zeros_like(batch_angle)
    ones = jnp.ones_like(batch_angle)
    axis_y = jnp.stack([-axis_x[:, 1], axis_x[:, 0], zeros], axis=-1)
    norm_y = jnp.linalg.norm(axis_y, axis=-1)
    axis_y = axis_y.at[:, 1].set(jnp.where(norm_y == 0, 1.0, axis_y[:, 1]))
    axis_x = axis_x / jnp.linalg.norm(axis_x, axis=-1, keepdims=True)
    axis_y = axis_y / jnp.linalg.norm(axis_y, axis=-1, keepdims=True)
    axis_z = jnp.cross(axis_x, axis_y)
    sin, cos = jnp.sin(batch_angle), jnp.cos(batch_angle)
    R1 = jnp.stack([ones, zeros, zeros,
                    zeros, cos, -sin,
                    zeros, sin, cos], axis=-1).reshape(-1, 3, 3)
    R2 = jnp.stack([axis_x, axis_y, axis_z], axis=-1)
    return jnp.matmul(R2, R1)


# ---------------------------------------------------------------------------
# Full forward (mirrors ApproachNet_view_fps_objectness.forward, is_training=False)
# ---------------------------------------------------------------------------
def approachnet_forward(params, seed_xyz, seed_features, num_view, num_sample):
    # TODO(synk): is_training path (graspness_label-driven mask) not implemented;
    #             eval-mode only, matching the previous version.
    end_points = {}
    B = seed_xyz.shape[0]
    end_points['fp2_xyz'] = seed_xyz

    # ---- graspable head (Pallas; graspness / objectness / graspness masks fused) ----
    gw1, gb1 = fold_bn(params['gh_w1'], params['gh_b1'], *params['gh_bn'])
    graspness_score, objectness_mask, graspness_mask = graspable_head_pallas(
        seed_features, gw1, gb1, params['gh_w2'], params['gh_b2'])
    end_points['graspness_score'] = graspness_score
    end_points['objectness_mask'] = objectness_mask

    # ---- masked FPS per batch (plain JAX; sequential data-dependent loop) ----
    graspable_inds = jax.vmap(
        lambda x, m: masked_fps_single(x, m, num_sample))(seed_xyz, graspness_mask)

    # ---- gathers (glue). NOTE: reference hard-codes 256 feature channels; we use C.
    graspable_xyz = jax.vmap(lambda x, i: x[i])(seed_xyz, graspable_inds)
    graspable_features = jax.vmap(lambda f, i: f[:, i])(seed_features, graspable_inds)
    fp2_graspness = jax.vmap(lambda g, i: g[i])(graspness_score, graspable_inds)
    end_points['fp2_xyz'] = graspable_xyz
    end_points['fp2_inds'] = graspable_inds
    end_points['fp2_features'] = graspable_features
    end_points['fp2_graspness'] = fp2_graspness

    # ---- view head (Pallas; view_score emitted directly in (B, M, V)) ----
    w1, b1 = fold_bn(params['c1_w'], params['c1_b'], *params['bn1'])
    w2, b2 = fold_bn(params['c2_w'], params['c2_b'], *params['bn2'])
    view_score, top_view_scores, top_view_inds = view_head_pallas(
        graspable_features, w1, b1, w2, b2, params['c3_w'], params['c3_b'], num_view)
    end_points['view_score'] = view_score

    # ---- template views / rotations (small glue) ----
    template_views = generate_grasp_views(num_view)                # (V, 3)
    vp_xyz = template_views[top_view_inds]                         # (B, M, 3)
    vp_xyz_flat = vp_xyz.reshape(-1, 3)
    batch_angle = jnp.zeros((vp_xyz_flat.shape[0],), vp_xyz.dtype)
    vp_rot = batch_viewpoint_params_to_matrix(-vp_xyz_flat, batch_angle)
    vp_rot = vp_rot.reshape(B, num_sample, 3, 3)

    end_points['grasp_top_view_inds'] = top_view_inds
    end_points['grasp_top_view_score'] = top_view_scores
    end_points['grasp_top_view_xyz'] = vp_xyz
    end_points['grasp_top_view_rot'] = vp_rot
    return end_points


# ---------------------------------------------------------------------------
# Deterministic parameter init
# ---------------------------------------------------------------------------
def _bn_params(key, n):
    k0, k1, k2, k3 = jax.random.split(key, 4)
    gamma = 1.0 + 0.1 * jax.random.normal(k0, (n,), jnp.float32)
    beta = 0.1 * jax.random.normal(k1, (n,), jnp.float32)
    mean = 0.1 * jax.random.normal(k2, (n,), jnp.float32)
    var = 1.0 + 0.1 * jnp.abs(jax.random.normal(k3, (n,), jnp.float32))
    return gamma, beta, mean, var


def init_params(key, C, V):
    ks = jax.random.split(key, 13)
    w = lambda k, s: (0.1 * jax.random.normal(k, s)).astype(jnp.float32)
    p = {}
    p['gh_w1'], p['gh_b1'] = w(ks[0], (C, C)), w(ks[1], (C,))
    p['gh_bn'] = _bn_params(ks[2], C)
    p['gh_w2'], p['gh_b2'] = w(ks[3], (3, C)), w(ks[4], (3,))
    p['c1_w'], p['c1_b'] = w(ks[5], (C, C)), w(ks[6], (C,))
    p['bn1'] = _bn_params(ks[7], C)
    p['c2_w'], p['c2_b'] = w(ks[8], (V, C)), w(ks[9], (V,))
    p['bn2'] = _bn_params(ks[10], V)
    p['c3_w'], p['c3_b'] = w(ks[11], (V, V)), w(ks[12], (V,))
    return p


if __name__ == "__main__":
    B = 2            # batch
    C = 32           # seed_feature_dim (small synthetic; real model uses 256)
    N = 1024         # num_seed points
    V = 16           # num_view (real model uses 300)
    M = 256          # FPS samples (real model uses 1024)

    key = jax.random.PRNGKey(0)
    k_xyz, k_feat, k_par = jax.random.split(key, 3)
    seed_xyz = jax.random.normal(k_xyz, (B, N, 3), jnp.float32)
    seed_features = jax.random.normal(k_feat, (B, C, N), jnp.float32)
    params = init_params(k_par, C, V)

    fwd = jax.jit(approachnet_forward, static_argnums=(3, 4))
    end_points = fwd(params, seed_xyz, seed_features, V, M)
    jax.block_until_ready(end_points)

    # sanity on shapes / index ranges
    assert end_points['graspness_score'].shape == (B, N)
    assert end_points['objectness_mask'].shape == (B, N)
    assert end_points['fp2_xyz'].shape == (B, M, 3)
    assert end_points['fp2_features'].shape == (B, C, M)
    assert end_points['view_score'].shape == (B, M, V)
    assert end_points['grasp_top_view_rot'].shape == (B, M, 3, 3)
    assert int(end_points['grasp_top_view_inds'].max()) < V
    assert int(end_points['grasp_top_view_inds'].min()) >= 0
    print("KERNEL_OK")
</pallas_src>

<mosaic_0001>
module attributes {stable_mosaic.version = 11 : i64} {
  func.func @_graspable_kernel(%arg0: i32, %arg1: i32, %arg2: memref<1x32x512xbf16, #tpu.memory_space<vmem>>, %arg3: memref<32x32xbf16, #tpu.memory_space<vmem>>, %arg4: memref<32x1xf32, #tpu.memory_space<vmem>>, %arg5: memref<8x32xbf16, #tpu.memory_space<vmem>>, %arg6: memref<8x1xf32, #tpu.memory_space<vmem>>, %arg7: memref<1x1x512xf32, #tpu.memory_space<vmem>>, %arg8: memref<1x1x512xi32, #tpu.memory_space<vmem>>, %arg9: memref<1x1x512xi32, #tpu.memory_space<vmem>>) attributes {dimension_semantics = [#tpu.dimension_semantics<parallel>, #tpu.dimension_semantics<parallel>], iteration_bounds = array<i64: 2, 2>, scalar_prefetch = 0 : i64, scratch_operands = 0 : i64, tpu.core_type = #tpu.core_type<tc>, window_params = [{transform_indices = @transform_0, window_bounds = array<i64: 1, 32, 512>}, {pipeline_mode = #tpu.pipeline_mode<synchronous>, transform_indices = @transform_1, window_bounds = array<i64: 32, 32>}, {pipeline_mode = #tpu.pipeline_mode<synchronous>, transform_indices = @transform_2, window_bounds = array<i64: 32, 1>}, {pipeline_mode = #tpu.pipeline_mode<synchronous>, transform_indices = @transform_3, window_bounds = array<i64: 8, 32>}, {pipeline_mode = #tpu.pipeline_mode<synchronous>, transform_indices = @transform_4, window_bounds = array<i64: 8, 1>}, {transform_indices = @transform_5, window_bounds = array<i64: 1, 1, 512>}, {transform_indices = @transform_6, window_bounds = array<i64: 1, 1, 512>}, {transform_indices = @transform_7, window_bounds = array<i64: 1, 1, 512>}]} {
    %c0 = arith.constant 0 : index
    %c0_0 = arith.constant 0 : index
    %c0_1 = arith.constant 0 : index
    %0 = vector.load %arg2[%c0, %c0_0, %c0_1] : memref<1x32x512xbf16, #tpu.memory_space<vmem>>, vector<1x32x512xbf16>
    %1 = vector.shape_cast %0 : vector<1x32x512xbf16> to vector<32x512xbf16>
    %c0_2 = arith.constant 0 : index
    %c0_3 = arith.constant 0 : index
    %2 = vector.load %arg3[%c0_2, %c0_3] : memref<32x32xbf16, #tpu.memory_space<vmem>>, vector<32x32xbf16>
    %cst = arith.constant dense<0.000000e+00> : vector<32x512xf32>
    %3 = tpu.matmul %2, %1, %cst {dimension_numbers = #tpu.dot_dimension_numbers<[1], [0], [0], [1], [0, 0, 1, 1], [], []>} : vector<32x32xbf16>, vector<32x512xbf16>, vector<32x512xf32> -> vector<32x512xf32>
    %c0_4 = arith.constant 0 : index
    %c0_5 = arith.constant 0 : index
    %4 = vector.load %arg4[%c0_4, %c0_5] : memref<32x1xf32, #tpu.memory_space<vmem>>, vector<32x1xf32>
    %5 = vector.broadcast %4 : vector<32x1xf32> to vector<32x512xf32>
    %6 = arith.addf %3, %5 : vector<32x512xf32>
    %cst_6 = arith.constant 0.000000e+00 : f32
    %7 = vector.broadcast %cst_6 : f32 to vector<32x512xf32>
    %8 = arith.maximumf %6, %7 : vector<32x512xf32>
    %c0_7 = arith.constant 0 : index
    %c0_8 = arith.constant 0 : index
    %9 = vector.load %arg5[%c0_7, %c0_8] : memref<8x32xbf16, #tpu.memory_space<vmem>>, vector<8x32xbf16>
    %10 = arith.truncf %8 : vector<32x512xf32> to vector<32x512xbf16>
    %cst_9 = arith.constant dense<0.000000e+00> : vector<8x512xf32>
    %11 = tpu.matmul %9, %10, %cst_9 {dimension_numbers = #tpu.dot_dimension_numbers<[1], [0], [0], [1], [0, 0, 1, 1], [], []>} : vector<8x32xbf16>, vector<32x512xbf16>, vector<8x512xf32> -> vector<8x512xf32>
    %c0_10 = arith.constant 0 : index
    %c0_11 = arith.constant 0 : index
    %12 = vector.load %arg6[%c0_10, %c0_11] : memref<8x1xf32, #tpu.memory_space<vmem>>, vector<8x1xf32>
    %13 = vector.broadcast %12 : vector<8x1xf32> to vector<8x512xf32>
    %14 = arith.addf %11, %13 : vector<8x512xf32>
    %15 = vector.extract_strided_slice %14 {offsets = [2, 0], sizes = [1, 512], strides = [1, 1]} : vector<8x512xf32> to vector<1x512xf32>
    %16 = vector.extract_strided_slice %14 {offsets = [1, 0], sizes = [1, 512], strides = [1, 1]} : vector<8x512xf32> to vector<1x512xf32>
    %17 = vector.extract_strided_slice %14 {offsets = [0, 0], sizes = [1, 512], strides = [1, 1]} : vector<8x512xf32> to vector<1x512xf32>
    %18 = arith.cmpf ogt, %16, %17 : vector<1x512xf32>
    %cst_12 = arith.constant 1.000000e-01 : f32
    %19 = vector.broadcast %cst_12 : f32 to vector<1x512xf32>
    %20 = arith.cmpf ogt, %15, %19 : vector<1x512xf32>
    %21 = arith.andi %20, %18 : vector<1x512xi1>
    %c0_13 = arith.constant 0 : index
    %c0_14 = arith.constant 0 : index
    %c0_15 = arith.constant 0 : index
    %22 = vector.load %arg7[%c0_13, %c0_14, %c0_15] : memref<1x1x512xf32, #tpu.memory_space<vmem>>, vector<1x1x512xf32>
    %23 = vector.shape_cast %22 : vector<1x1x512xf32> to vector<1x512xf32>
    %24 = vector.shape_cast %15 : vector<1x512xf32> to vector<1x1x512xf32>
    tpu.vector_store %arg7[%c0_13, %c0_14, %c0_15], %24 {strides = array<i32>} : memref<1x1x512xf32, #tpu.memory_space<vmem>>, vector<1x1x512xf32>,
    %25 = arith.extui %18 : vector<1x512xi1> to vector<1x512xi32>
    %c0_16 = arith.constant 0 : index
    %c0_17 = arith.constant 0 : index
    %c0_18 = arith.constant 0 : index
    %26 = vector.load %arg8[%c0_16, %c0_17, %c0_18] : memref<1x1x512xi32, #tpu.memory_space<vmem>>, vector<1x1x512xi32>
    %27 = vector.shape_cast %26 : vector<1x1x512xi32> to vector<1x512xi32>
    %28 = vector.shape_cast %25 : vector<1x512xi32> to vector<1x1x512xi32>
    tpu.vector_store %arg8[%c0_16, %c0_17, %c0_18], %28 {strides = array<i32>} : memref<1x1x512xi32, #tpu.memory_space<vmem>>, vector<1x1x512xi32>,
    %29 = arith.extui %21 : vector<1x512xi1> to vector<1x512xi32>
    %c0_19 = arith.constant 0 : index
    %c0_20 = arith.constant 0 : index
    %c0_21 = arith.constant 0 : index
    %30 = vector.load %arg9[%c0_19, %c0_20, %c0_21] : memref<1x1x512xi32, #tpu.memory_space<vmem>>, vector<1x1x512xi32>
    %31 = vector.shape_cast %30 : vector<1x1x512xi32> to vector<1x512xi32>
    %32 = vector.shape_cast %29 : vector<1x512xi32> to vector<1x1x512xi32>
    tpu.vector_store %arg9[%c0_19, %c0_20, %c0_21], %32 {strides = array<i32>} : memref<1x1x512xi32, #tpu.memory_space<vmem>>, vector<1x1x512xi32>,
    return
  }
  func.func @transform_0(%arg0: i32, %arg1: i32) -> (i32, i32, i32) {
    %c0_i32 = arith.constant 0 : i32
    %c0_i32_0 = arith.constant 0 : i32
    return %arg0, %c0_i32, %arg1 : i32, i32, i32
  }
  func.func @transform_1(%arg0: i32, %arg1: i32) -> (i32, i32) {
    %c0_i32 = arith.constant 0 : i32
    %c0_i32_0 = arith.constant 0 : i32
    %c0_i32_1 = arith.constant 0 : i32
    return %c0_i32, %c0_i32_0 : i32, i32
  }
  func.func @transform_2(%arg0: i32, %arg1: i32) -> (i32, i32) {
    %c0_i32 = arith.constant 0 : i32
    %c0_i32_0 = arith.constant 0 : i32
    %c0_i32_1 = arith.constant 0 : i32
    return %c0_i32, %c0_i32_0 : i32, i32
  }
  func.func @transform_3(%arg0: i32, %arg1: i32) -> (i32, i32) {
    %c0_i32 = arith.constant 0 : i32
    %c0_i32_0 = arith.constant 0 : i32
    %c0_i32_1 = arith.constant 0 : i32
    return %c0_i32, %c0_i32_0 : i32, i32
  }
  func.func @transform_4(%arg0: i32, %arg1: i32) -> (i32, i32) {
    %c0_i32 = arith.constant 0 : i32
    %c0_i32_0 = arith.constant 0 : i32
    %c0_i32_1 = arith.constant 0 : i32
    return %c0_i32, %c0_i32_0 : i32, i32
  }
  func.func @transform_5(%arg0: i32, %arg1: i32) -> (i32, i32, i32) {
    %c0_i32 = arith.constant 0 : i32
    %c0_i32_0 = arith.constant 0 : i32
    return %arg0, %c0_i32, %arg1 : i32, i32, i32
  }
  func.func @transform_6(%arg0: i32, %arg1: i32) -> (i32, i32, i32) {
    %c0_i32 = arith.constant 0 : i32
    %c0_i32_0 = arith.constant 0 : i32
    return %arg0, %c0_i32, %arg1 : i32, i32, i32
  }
  func.func @transform_7(%arg0: i32, %arg1: i32) -> (i32, i32, i32) {
    %c0_i32 = arith.constant 0 : i32
    %c0_i32_0 = arith.constant 0 : i32
    return %arg0, %c0_i32, %arg1 : i32, i32, i32
  }
}

module attributes {stable_mosaic.version = 11 : i64} {
  func.func @_view_kernel(%arg0: i32, %arg1: i32, %arg2: memref<1x32x256xbf16, #tpu.memory_space<vmem>>, %arg3: memref<32x32xbf16, #tpu.memory_space<vmem>>, %arg4: memref<32x1xf32, #tpu.memory_space<vmem>>, %arg5: memref<16x32xbf16, #tpu.memory_space<vmem>>, %arg6: memref<16x1xf32, #tpu.memory_space<vmem>>, %arg7: memref<16x16xbf16, #tpu.memory_space<vmem>>, %arg8: memref<1x16xf32, #tpu.memory_space<vmem>>, %arg9: memref<1x256x16xf32, #tpu.memory_space<vmem>>, %arg10: memref<1x256x1xf32, #tpu.memory_space<vmem>>, %arg11: memref<1x256x1xi32, #tpu.memory_space<vmem>>) attributes {dimension_semantics = [#tpu.dimension_semantics<parallel>, #tpu.dimension_semantics<parallel>], iteration_bounds = array<i64: 2, 1>, scalar_prefetch = 0 : i64, scratch_operands = 0 : i64, tpu.core_type = #tpu.core_type<tc>, window_params = [{transform_indices = @transform_0, window_bounds = array<i64: 1, 32, 256>}, {pipeline_mode = #tpu.pipeline_mode<synchronous>, transform_indices = @transform_1, window_bounds = array<i64: 32, 32>}, {pipeline_mode = #tpu.pipeline_mode<synchronous>, transform_indices = @transform_2, window_bounds = array<i64: 32, 1>}, {pipeline_mode = #tpu.pipeline_mode<synchronous>, transform_indices = @transform_3, window_bounds = array<i64: 16, 32>}, {pipeline_mode = #tpu.pipeline_mode<synchronous>, transform_indices = @transform_4, window_bounds = array<i64: 16, 1>}, {pipeline_mode = #tpu.pipeline_mode<synchronous>, transform_indices = @transform_5, window_bounds = array<i64: 16, 16>}, {pipeline_mode = #tpu.pipeline_mode<synchronous>, transform_indices = @transform_6, window_bounds = array<i64: 1, 16>}, {transform_indices = @transform_7, window_bounds = array<i64: 1, 256, 16>}, {transform_indices = @transform_8, window_bounds = array<i64: 1, 256, 1>}, {transform_indices = @transform_9, window_bounds = array<i64: 1, 256, 1>}]} {
    %c0 = arith.constant 0 : index
    %c0_0 = arith.constant 0 : index
    %c0_1 = arith.constant 0 : index
    %0 = vector.load %arg2[%c0, %c0_0, %c0_1] : memref<1x32x256xbf16, #tpu.memory_space<vmem>>, vector<1x32x256xbf16>
    %1 = vector.shape_cast %0 : vector<1x32x256xbf16> to vector<32x256xbf16>
    %c0_2 = arith.constant 0 : index
    %c0_3 = arith.constant 0 : index
    %2 = vector.load %arg3[%c0_2, %c0_3] : memref<32x32xbf16, #tpu.memory_space<vmem>>, vector<32x32xbf16>
    %cst = arith.constant dense<0.000000e+00> : vector<32x256xf32>
    %3 = tpu.matmul %2, %1, %cst {dimension_numbers = #tpu.dot_dimension_numbers<[1], [0], [0], [1], [0, 0, 1, 1], [], []>} : vector<32x32xbf16>, vector<32x256xbf16>, vector<32x256xf32> -> vector<32x256xf32>
    %c0_4 = arith.constant 0 : index
    %c0_5 = arith.constant 0 : index
    %4 = vector.load %arg4[%c0_4, %c0_5] : memref<32x1xf32, #tpu.memory_space<vmem>>, vector<32x1xf32>
    %5 = vector.broadcast %4 : vector<32x1xf32> to vector<32x256xf32>
    %6 = arith.addf %3, %5 : vector<32x256xf32>
    %cst_6 = arith.constant 0.000000e+00 : f32
    %7 = vector.broadcast %cst_6 : f32 to vector<32x256xf32>
    %8 = arith.maximumf %6, %7 : vector<32x256xf32>
    %c0_7 = arith.constant 0 : index
    %c0_8 = arith.constant 0 : index
    %9 = vector.load %arg5[%c0_7, %c0_8] : memref<16x32xbf16, #tpu.memory_space<vmem>>, vector<16x32xbf16>
    %10 = arith.truncf %8 : vector<32x256xf32> to vector<32x256xbf16>
    %cst_9 = arith.constant dense<0.000000e+00> : vector<16x256xf32>
    %11 = tpu.matmul %9, %10, %cst_9 {dimension_numbers = #tpu.dot_dimension_numbers<[1], [0], [0], [1], [0, 0, 1, 1], [], []>} : vector<16x32xbf16>, vector<32x256xbf16>, vector<16x256xf32> -> vector<16x256xf32>
    %c0_10 = arith.constant 0 : index
    %c0_11 = arith.constant 0 : index
    %12 = vector.load %arg6[%c0_10, %c0_11] : memref<16x1xf32, #tpu.memory_space<vmem>>, vector<16x1xf32>
    %13 = vector.broadcast %12 : vector<16x1xf32> to vector<16x256xf32>
    %14 = arith.addf %11, %13 : vector<16x256xf32>
    %cst_12 = arith.constant 0.000000e+00 : f32
    %15 = vector.broadcast %cst_12 : f32 to vector<16x256xf32>
    %16 = arith.maximumf %14, %15 : vector<16x256xf32>
    %17 = arith.truncf %16 : vector<16x256xf32> to vector<16x256xbf16>
    %c0_13 = arith.constant 0 : index
    %c0_14 = arith.constant 0 : index
    %18 = vector.load %arg7[%c0_13, %c0_14] : memref<16x16xbf16, #tpu.memory_space<vmem>>, vector<16x16xbf16>
    %cst_15 = arith.constant dense<0.000000e+00> : vector<256x16xf32>
    %19 = tpu.matmul %17, %18, %cst_15 {dimension_numbers = #tpu.dot_dimension_numbers<[0], [0], [1], [1], [0, 1, 1, 1], [], []>} : vector<16x256xbf16>, vector<16x16xbf16>, vector<256x16xf32> -> vector<256x16xf32>
    %c0_16 = arith.constant 0 : index
    %c0_17 = arith.constant 0 : index
    %20 = vector.load %arg8[%c0_16, %c0_17] : memref<1x16xf32, #tpu.memory_space<vmem>>, vector<1x16xf32>
    %21 = vector.broadcast %20 : vector<1x16xf32> to vector<256x16xf32>
    %22 = arith.addf %19, %21 : vector<256x16xf32>
    %c0_18 = arith.constant 0 : index
    %c0_19 = arith.constant 0 : index
    %c0_20 = arith.constant 0 : index
    %23 = vector.load %arg9[%c0_18, %c0_19, %c0_20] : memref<1x256x16xf32, #tpu.memory_space<vmem>>, vector<1x256x16xf32>
    %24 = vector.shape_cast %23 : vector<1x256x16xf32> to vector<256x16xf32>
    %25 = vector.shape_cast %22 : vector<256x16xf32> to vector<1x256x16xf32>
    tpu.vector_store %arg9[%c0_18, %c0_19, %c0_20], %25 {strides = array<i32>} : memref<1x256x16xf32, #tpu.memory_space<vmem>>, vector<1x256x16xf32>,
    %cst_21 = arith.constant dense<0xFF800000> : vector<256xf32>
    %26 = vector.multi_reduction <maximumf>, %22, %cst_21 [1] : vector<256x16xf32> to vector<256xf32>
    %27 = vector.shape_cast %26 : vector<256xf32> to vector<256x1xf32>
    %28 = tpu.iota {dimensions = array<i32: 1>} : vector<256x16xi32>
    %29 = vector.broadcast %27 : vector<256x1xf32> to vector<256x16xf32>
    %30 = arith.cmpf oeq, %22, %29 : vector<256x16xf32>
    %c16_i32 = arith.constant 16 : i32
    %31 = vector.broadcast %c16_i32 : i32 to vector<256x16xi32>
    %32 = arith.select %30, %28, %31 : vector<256x16xi1>, vector<256x16xi32>
    %cst_22 = arith.constant dense<2147483647> : vector<256xi32>
    %33 = vector.multi_reduction <minsi>, %32, %cst_22 [1] : vector<256x16xi32> to vector<256xi32>
    %34 = vector.shape_cast %33 : vector<256xi32> to vector<256x1xi32>
    %c0_23 = arith.constant 0 : index
    %c0_24 = arith.constant 0 : index
    %c0_25 = arith.constant 0 : index
    %35 = vector.load %arg10[%c0_23, %c0_24, %c0_25] : memref<1x256x1xf32, #tpu.memory_space<vmem>>, vector<1x256x1xf32>
    %36 = vector.shape_cast %35 : vector<1x256x1xf32> to vector<256x1xf32>
    %37 = vector.shape_cast %27 : vector<256x1xf32> to vector<1x256x1xf32>
    tpu.vector_store %arg10[%c0_23, %c0_24, %c0_25], %37 {strides = array<i32>} : memref<1x256x1xf32, #tpu.memory_space<vmem>>, vector<1x256x1xf32>,
    %c0_26 = arith.constant 0 : index
    %c0_27 = arith.constant 0 : index
    %c0_28 = arith.constant 0 : index
    %38 = vector.load %arg11[%c0_26, %c0_27, %c0_28] : memref<1x256x1xi32, #tpu.memory_space<vmem>>, vector<1x256x1xi32>
    %39 = vector.shape_cast %38 : vector<1x256x1xi32> to vector<256x1xi32>
    %40 = vector.shape_cast %34 : vector<256x1xi32> to vector<1x256x1xi32>
    tpu.vector_store %arg11[%c0_26, %c0_27, %c0_28], %40 {strides = array<i32>} : memref<1x256x1xi32, #tpu.memory_space<vmem>>, vector<1x256x1xi32>,
    return
  }
  func.func @transform_0(%arg0: i32, %arg1: i32) -> (i32, i32, i32) {
    %c0_i32 = arith.constant 0 : i32
    %c0_i32_0 = arith.constant 0 : i32
    return %arg0, %c0_i32, %arg1 : i32, i32, i32
  }
  func.func @transform_1(%arg0: i32, %arg1: i32) -> (i32, i32) {
    %c0_i32 = arith.constant 0 : i32
    %c0_i32_0 = arith.constant 0 : i32
    %c0_i32_1 = arith.constant 0 : i32
    return %c0_i32, %c0_i32_0 : i32, i32
  }
  func.func @transform_2(%arg0: i32, %arg1: i32) -> (i32, i32) {
    %c0_i32 = arith.constant 0 : i32
    %c0_i32_0 = arith.constant 0 : i32
    %c0_i32_1 = arith.constant 0 : i32
    return %c0_i32, %c0_i32_0 : i32, i32
  }
  func.func @transform_3(%arg0: i32, %arg1: i32) -> (i32, i32) {
    %c0_i32 = arith.constant 0 : i32
    %c0_i32_0 = arith.constant 0 : i32
    %c0_i32_1 = arith.constant 0 : i32
    return %c0_i32, %c0_i32_0 : i32, i32
  }
  func.func @transform_4(%arg0: i32, %arg1: i32) -> (i32, i32) {
    %c0_i32 = arith.constant 0 : i32
    %c0_i32_0 = arith.constant 0 : i32
    %c0_i32_1 = arith.constant 0 : i32
    return %c0_i32, %c0_i32_0 : i32, i32
  }
  func.func @transform_5(%arg0: i32, %arg1: i32) -> (i32, i32) {
    %c0_i32 = arith.constant 0 : i32
    %c0_i32_0 = arith.constant 0 : i32
    %c0_i32_1 = arith.constant 0 : i32
    return %c0_i32, %c0_i32_0 : i32, i32
  }
  func.func @transform_6(%arg0: i32, %arg1: i32) -> (i32, i32) {
    %c0_i32 = arith.constant 0 : i32
    %c0_i32_0 = arith.constant 0 : i32
    %c0_i32_1 = arith.constant 0 : i32
    return %c0_i32, %c0_i32_0 : i32, i32
  }
  func.func @transform_7(%arg0: i32, %arg1: i32) -> (i32, i32, i32) {
    %c0_i32 = arith.constant 0 : i32
    %c0_i32_0 = arith.constant 0 : i32
    return %arg0, %arg1, %c0_i32 : i32, i32, i32
  }
  func.func @transform_8(%arg0: i32, %arg1: i32) -> (i32, i32, i32) {
    %c0_i32 = arith.constant 0 : i32
    %c0_i32_0 = arith.constant 0 : i32
    return %arg0, %arg1, %c0_i32 : i32, i32, i32
  }
  func.func @transform_9(%arg0: i32, %arg1: i32) -> (i32, i32, i32) {
    %c0_i32 = arith.constant 0 : i32
    %c0_i32_0 = arith.constant 0 : i32
    return %arg0, %arg1, %c0_i32 : i32, i32, i32
  }
}

</mosaic_0001>

<llo_original>
// kernel: approachnet_forward.2
$region0: #{approachnet_forward.2}
  #allocation0 [shape = 'u32[]', space=smem, size = 0x4, offset = 0x4, fixed_abs, tag = 'smem constant byte address 0x4 - core index']
  #allocation1 [shape = 'u32[72,128]{1,0:T(1,128)}', space=vmem, size = 0x9000, scoped, tag = 'internal scratch']
  %s0 = inlined_call_operand.vmem [shape: bf16[2,32,1024], index: 0, kind: input, shape index: {}]
  %s1 = inlined_call_operand.vmem [shape: bf16[32,32], index: 1, kind: input, shape index: {}]
  %s2 = inlined_call_operand.vmem [shape: f32[32,1], index: 2, kind: input, shape index: {}]
  %s3 = inlined_call_operand.vmem [shape: bf16[8,32], index: 3, kind: input, shape index: {}]
  %s4 = inlined_call_operand.vmem [shape: f32[8,1], index: 4, kind: input, shape index: {}]
  %s5 = inlined_call_operand.vmem [shape: f32[2,1,1024], index: 5, kind: output, shape index: {0}]
  %s6 = inlined_call_operand.vmem [shape: s32[2,1,1024], index: 6, kind: output, shape index: {1}]
  %s7 = inlined_call_operand.vmem [shape: s32[2,1,1024], index: 7, kind: output, shape index: {2}]
  %8 = xla_tuple %s5, %s6, %s7
  %s9 = sld [smem:[#allocation0]]
  $region92: #{approachnet_forward.2} parent=0
    _
  %s11 = ssub.s32 1, %s9
  %s12 = scalar_select 0, %s11, %s9
  $region1: #{approachnet_forward.2} parent=0
    #allocation2 [shape = 'u8[65536]{0}', space=vmem, size = 0x10000, scoped, tag = 'input window, operand 0']
    loop: start=0, step=1, limit=6
    $region2: #{approachnet_forward.2} parent=1 // loop_pre_header
      _
    $region3: #{approachnet_forward.2} parent=1 // loop_header
      %s14 = sphi 0, %s18
      %p15 = scmp.ge.s32.totalorder %s14, 6
      %s21 = sphi 0, %s33
      %s22 = sphi 0, %s29
      %s23 = sphi 0, %s21
      %s24 = sphi 0, %s22
      %s25 = sphi 0, %s23
      %s26 = sphi 0, %s24
      %s38 = sphi 0, %s40
      %s41 = sphi 0, %s38
      %s42 = sphi 0, %s41
      %s58 = sphi 0, %s42
      %s62 = sphi 0, %s62
      %s64 = sphi 0, %s62
      %s65 = sphi 0, %s64
      %s79 = sphi 0, %s65
      %s83 = sphi 0, %s83
      %s85 = sphi 0, %s83
      %s86 = sphi 0, %s85
      %s100 = sphi 0, %s86
      %s104 = sphi 0, %s104
      %s106 = sphi 0, %s104
      %s107 = sphi 0, %s106
      %s121 = sphi 0, %s107
      %s125 = sphi 0, %s125
      %s127 = sphi 0, %s125
      %s128 = sphi 0, %s127
      %s142 = sphi 0, %s128
      %s150 = sphi 0, %s152
      %s153 = sphi 0, %s150
      %s154 = sphi 0, %s153
      %s170 = sphi 0, %s154
      %s178 = sphi 0, %s180
      %s181 = sphi 0, %s178
      %s182 = sphi 0, %s181
      %s198 = sphi 0, %s182
      %s206 = sphi 0, %s208
      %s209 = sphi 0, %s206
      %s210 = sphi 0, %s209
      %s226 = sphi 0, %s210
    $region4: #{approachnet_forward.2} parent=1 // loop_header_branch
      %17 = sbr.rel (%p15) target = $region8
    $region5: #{approachnet_forward.2} parent=1 // loop_body
      %s19 = ssub.s32 %s14, 1
      %s20 = ssub.s32 %s14, 2
      %s27 = sadd.s32 1, %s22
      %p28 = scmp.ge.s32.totalorder %s27, 2
      %s29 = scalar_select %p28, 0, %s27
      %s30 = sadd.s32 1, %s21
      %s31 = scalar_select %p28, %s30, %s21
      %p32 = scmp.ge.s32.totalorder %s31, 2
      %s33 = scalar_select %p32, 0, %s31
      %s34 = ssub.s32 %s21, %s33
      %s35 = ssub.s32 %s22, %s29
      %s36 = sor.u32 %s34, %s35
      %p37 = scmp.eq.s32.totalorder %s36, 0
      %s39 = sadd.s32 %s38, 1
      %s40 = scalar_select %p37, %s38, %s39
      %p43 = pneg %p37
      %p44 = scmp.eq.s32.totalorder %s14, 3
      %p45 = por %p43, %p44
      %p46 = scmp.ne.s32.totalorder %s38, %s41
      %p47 = scmp.eq.s32.totalorder %s14, 0
      %p48 = por %p46, %p47
      %p49 = scmp.ne.s32.totalorder %s38, %s41
      %p50 = scmp.eq.s32.totalorder %s19, 3
      %p51 = por %p49, %p50
      %p52 = scmp.ne.s32.totalorder %s41, %s42
      %p53 = scmp.eq.s32.totalorder %s19, 0
      %p54 = por %p52, %p53
      %p55 = scmp.ne.s32.totalorder %s41, %s42
      %p56 = scmp.eq.s32.totalorder %s20, 3
      %p57 = por %p55, %p56
      %p59 = scmp.ne.s32.totalorder %s42, %s58
      %p60 = scmp.eq.s32.totalorder %s20, 0
      %p61 = por %p59, %p60
      %s63 = sadd.s32 %s62, 1
      %p66 = scmp.eq.s32.totalorder %s14, 3
      %p67 = scmp.ne.s32.totalorder %s62, %s64
      %p68 = scmp.eq.s32.totalorder %s14, 0
      %p69 = por %p67, %p68
      %p70 = scmp.ne.s32.totalorder %s62, %s64
      %p71 = scmp.eq.s32.totalorder %s19, 3
      %p72 = por %p70, %p71
      %p73 = scmp.ne.s32.totalorder %s64, %s65
      %p74 = scmp.eq.s32.totalorder %s19, 0
      %p75 = por %p73, %p74
      %p76 = scmp.ne.s32.totalorder %s64, %s65
      %p77 = scmp.eq.s32.totalorder %s20, 3
      %p78 = por %p76, %p77
      %p80 = scmp.ne.s32.totalorder %s65, %s79
      %p81 = scmp.eq.s32.totalorder %s20, 0
      %p82 = por %p80, %p81
      %s84 = sadd.s32 %s83, 1
      %p87 = scmp.eq.s32.totalorder %s14, 3
      %p88 = scmp.ne.s32.totalorder %s83, %s85
      %p89 = scmp.eq.s32.totalorder %s14, 0
      %p90 = por %p88, %p89
      %p91 = scmp.ne.s32.totalorder %s83, %s85
      %p92 = scmp.eq.s32.totalorder %s19, 3
      %p93 = por %p91, %p92
      %p94 = scmp.ne.s32.totalorder %s85, %s86
      %p95 = scmp.eq.s32.totalorder %s19, 0
      %p96 = por %p94, %p95
      %p97 = scmp.ne.s32.totalorder %s85, %s86
      %p98 = scmp.eq.s32.totalorder %s20, 3
      %p99 = por %p97, %p98
      %p101 = scmp.ne.s32.totalorder %s86, %s100
      %p102 = scmp.eq.s32.totalorder %s20, 0
      %p103 = por %p101, %p102
      %s105 = sadd.s32 %s104, 1
      %p108 = scmp.eq.s32.totalorder %s14, 3
      %p109 = scmp.ne.s32.totalorder %s104, %s106
      %p110 = scmp.eq.s32.totalorder %s14, 0
      %p111 = por %p109, %p110
      %p112 = scmp.ne.s32.totalorder %s104, %s106
      %p113 = scmp.eq.s32.totalorder %s19, 3
      %p114 = por %p112, %p113
      %p115 = scmp.ne.s32.totalorder %s106, %s107
      %p116 = scmp.eq.s32.totalorder %s19, 0
      %p117 = por %p115, %p116
      %p118 = scmp.ne.s32.totalorder %s106, %s107
      %p119 = scmp.eq.s32.totalorder %s20, 3
      %p120 = por %p118, %p119
      %p122 = scmp.ne.s32.totalorder %s107, %s121
      %p123 = scmp.eq.s32.totalorder %s20, 0
      %p124 = por %p122, %p123
      %s126 = sadd.s32 %s125, 1
      %p129 = scmp.eq.s32.totalorder %s14, 3
      %p130 = scmp.ne.s32.totalorder %s125, %s127
      %p131 = scmp.eq.s32.totalorder %s14, 0
      %p132 = por %p130, %p131
      %p133 = scmp.ne.s32.totalorder %s125, %s127
      %p134 = scmp.eq.s32.totalorder %s19, 3
      %p135 = por %p133, %p134
      %p136 = scmp.ne.s32.totalorder %s127, %s128
      %p137 = scmp.eq.s32.totalorder %s19, 0
      %p138 = por %p136, %p137
      %p139 = scmp.ne.s32.totalorder %s127, %s128
      %p140 = scmp.eq.s32.totalorder %s20, 3
      %p141 = por %p139, %p140
      %p143 = scmp.ne.s32.totalorder %s128, %s142
      %p144 = scmp.eq.s32.totalorder %s20, 0
      %p145 = por %p143, %p144
      %s146 = ssub.s32 %s21, %s33
      %s147 = ssub.s32 %s22, %s29
      %s148 = sor.u32 %s146, %s147
      %p149 = scmp.eq.s32.totalorder %s148, 0
      %s151 = sadd.s32 %s150, 1
      %s152 = scalar_select %p149, %s150, %s151
      %p155 = pneg %p149
      %p156 = scmp.eq.s32.totalorder %s14, 3
      %p157 = por %p155, %p156
      %p158 = scmp.ne.s32.totalorder %s150, %s153
      %p159 = scmp.eq.s32.totalorder %s14, 0
      %p160 = por %p158, %p159
      %p161 = scmp.ne.s32.totalorder %s150, %s153
      %p162 = scmp.eq.s32.totalorder %s19, 3
      %p163 = por %p161, %p162
      %p164 = scmp.ne.s32.totalorder %s153, %s154
      %p165 = scmp.eq.s32.totalorder %s19, 0
      %p166 = por %p164, %p165
      %p167 = scmp.ne.s32.totalorder %s153, %s154
      %p168 = scmp.eq.s32.totalorder %s20, 3
      %p169 = por %p167, %p168
      %p171 = scmp.ne.s32.totalorder %s154, %s170
      %p172 = scmp.eq.s32.totalorder %s20, 0
      %p173 = por %p171, %p172
      %s174 = ssub.s32 %s21, %s33
      %s175 = ssub.s32 %s22, %s29
      %s176 = sor.u32 %s174, %s175
      %p177 = scmp.eq.s32.totalorder %s176, 0
      %s179 = sadd.s32 %s178, 1
      %s180 = scalar_select %p177, %s178, %s179
      %p183 = pneg %p177
      %p184 = scmp.eq.s32.totalorder %s14, 3
      %p185 = por %p183, %p184
      %p186 = scmp.ne.s32.totalorder %s178, %s181
      %p187 = scmp.eq.s32.totalorder %s14, 0
      %p188 = por %p186, %p187
      %p189 = scmp.ne.s32.totalorder %s178, %s181
      %p190 = scmp.eq.s32.totalorder %s19, 3
      %p191 = por %p189, %p190
      %p192 = scmp.ne.s32.totalorder %s181, %s182
      %p193 = scmp.eq.s32.totalorder %s19, 0
      %p194 = por %p192, %p193
      %p195 = scmp.ne.s32.totalorder %s181, %s182
      %p196 = scmp.eq.s32.totalorder %s20, 3
      %p197 = por %p195, %p196
      %p199 = scmp.ne.s32.totalorder %s182, %s198
      %p200 = scmp.eq.s32.totalorder %s20, 0
      %p201 = por %p199, %p200
      %s202 = ssub.s32 %s21, %s33
      %s203 = ssub.s32 %s22, %s29
      %s204 = sor.u32 %s202, %s203
      %p205 = scmp.eq.s32.totalorder %s204, 0
      %s207 = sadd.s32 %s206, 1
      %s208 = scalar_select %p205, %s206, %s207
      %p211 = pneg %p205
      %p212 = scmp.eq.s32.totalorder %s14, 3
      %p213 = por %p211, %p212
      %p214 = scmp.ne.s32.totalorder %s206, %s209
      %p215 = scmp.eq.s32.totalorder %s14, 0
      %p216 = por %p214, %p215
      %p217 = scmp.ne.s32.totalorder %s206, %s209
      %p218 = scmp.eq.s32.totalorder %s19, 3
      %p219 = por %p217, %p218
      %p220 = scmp.ne.s32.totalorder %s209, %s210
      %p221 = scmp.eq.s32.totalorder %s19, 0
      %p222 = por %p220, %p221
      %p223 = scmp.ne.s32.totalorder %s209, %s210
      %p224 = scmp.eq.s32.totalorder %s20, 3
      %p225 = por %p223, %p224
      %p227 = scmp.ne.s32.totalorder %s210, %s226
      %p228 = scmp.eq.s32.totalorder %s20, 0
      %p229 = por %p227, %p228
      %p230 = scmp.le.s32.totalorder 1, %s14
      %p231 = scmp.lt.s32.totalorder %s14, 5
      %p232 = pnand %p230, %p231
      %p233 = pneg %p232
      // Predicated region
      $region9: #{approachnet_forward.2} parent=5 // pred_check
        _
      $region10: #{approachnet_forward.2} parent=5 // pred_check_branch
        %235 = sbr.rel (%p232) target = $region12
      $region11: #{approachnet_forward.2} parent=5 // pred_region
        %s236 = ssub.s32 %s14, 1
        // Predicated region
        $region13: #{approachnet_forward.2} parent=11 // pred_check
          %p237 = pneg %p75
        $region14: #{approachnet_forward.2} parent=11 // pred_check_branch
          %239 = sbr.rel (%p237) target = $region16
        $region15: #{approachnet_forward.2} parent=11 // pred_region
          _
        $region16: #{approachnet_forward.2} parent=11 // pred_fallthru
          _
        // Predicated region
        $region17: #{approachnet_forward.2} parent=11 // pred_check
          %p240 = pneg %p96
        $region18: #{approachnet_forward.2} parent=11 // pred_check_branch
          %242 = sbr.rel (%p240) target = $region20
        $region19: #{approachnet_forward.2} parent=11 // pred_region
          _
        $region20: #{approachnet_forward.2} parent=11 // pred_fallthru
          _
        // Predicated region
        $region21: #{approachnet_forward.2} parent=11 // pred_check
          %p243 = pneg %p117
        $region22: #{approachnet_forward.2} parent=11 // pred_check_branch
          %245 = sbr.rel (%p243) target = $region24
        $region23: #{approachnet_forward.2} parent=11 // pred_region
          _
        $region24: #{approachnet_forward.2} parent=11 // pred_fallthru
          _
        // Predicated region
        $region25: #{approachnet_forward.2} parent=11 // pred_check
          %p246 = pneg %p138
        $region26: #{approachnet_forward.2} parent=11 // pred_check_branch
          %248 = sbr.rel (%p246) target = $region28
        $region27: #{approachnet_forward.2} parent=11 // pred_region
          _
        $region28: #{approachnet_forward.2} parent=11 // pred_fallthru
          _
      $region12: #{approachnet_forward.2} parent=5 // pred_fallthru
        _
      %p249 = scmp.lt.s32.totalorder %s14, 4
      // Predicated region
      $region29: #{approachnet_forward.2} parent=5 // pred_check
        %p250 = pneg %p249
      $region30: #{approachnet_forward.2} parent=5 // pred_check_branch
        %252 = sbr.rel (%p250) target = $region32
      $region31: #{approachnet_forward.2} parent=5 // pred_region
        // Predicated region
        $region33: #{approachnet_forward.2} parent=31 // pred_check
          %p253 = pneg %p48
        $region34: #{approachnet_forward.2} parent=31 // pred_check_branch
          %255 = sbr.rel (%p253) target = $region36
        $region35: #{approachnet_forward.2} parent=31 // pred_region
          %s256 = sand.u32 %s38, 1
          %s257 = sand.u32 %s38, 1
          %s258 = smul.addr %s257, 64
          %s259 = scalar_lea.vmem [#allocation2], %s258
          %s260 = smul.u32 4, %s22
          %s261 = smul.addr %s21, 32
          %s262 = sadd.s32 %s260, %s261
          %s263 = smul.addr %s262, 4
          %s264 = scalar_lea.vmem %s0, %s263
          // Predicated region
          $region37: #{approachnet_forward.2} parent=35 // pred_check
            _
          $region38: #{approachnet_forward.2} parent=35 // pred_check_branch
            %266 = sbr.rel (0) target = $region40
          $region39: #{approachnet_forward.2} parent=35 // pred_region
            // Predicated region
            $region41: #{approachnet_forward.2} parent=39 // pred_check
              _
            $region42: #{approachnet_forward.2} parent=39 // pred_check_branch
              %268 = sbr.rel (0) target = $region44
            $region43: #{approachnet_forward.2} parent=39 // pred_region
              loop: start=0, step=1, limit=1
              $region45: #{approachnet_forward.2} parent=43 // loop_pre_header
                _
              $region46: #{approachnet_forward.2} parent=43 // loop_header
                %s270 = sphi 0, %s274
                %p271 = scmp.ge.s32.totalorder %s270, 1
                %s275 = sphi %s264, %s264
                %s276 = sphi %s259, %s259
              $region47: #{approachnet_forward.2} parent=43 // loop_header_branch
                %273 = sbr.rel (%p271) target = $region51
              $region48: #{approachnet_forward.2} parent=43 // loop_body
                %v277 = vld [vmem:[%s275] sm:$0xff]
                %278 = vst [vmem:[%s276] sm:$0xff] %v277
                %v279 = vld [vmem:[%s275 + $0x8] sm:$0xff]
                %280 = vst [vmem:[%s276 + $0x8] sm:$0xff] %v279
                %v281 = vld [vmem:[%s275 + $0x20] sm:$0xff]
                %282 = vst [vmem:[%s276 + $0x10] sm:$0xff] %v281
                %v283 = vld [vmem:[%s275 + $0x28] sm:$0xff]
                %284 = vst [vmem:[%s276 + $0x18] sm:$0xff] %v283
                %v285 = vld [vmem:[%s275 + $0x40] sm:$0xff]
                %286 = vst [vmem:[%s276 + $0x20] sm:$0xff] %v285
                %v287 = vld [vmem:[%s275 + $0x48] sm:$0xff]
                %288 = vst [vmem:[%s276 + $0x28] sm:$0xff] %v287
                %v289 = vld [vmem:[%s275 + $0x60] sm:$0xff]
                %290 = vst [vmem:[%s276 + $0x30] sm:$0xff] %v289
                %v291 = vld [vmem:[%s275 + $0x68] sm:$0xff]
                %292 = vst [vmem:[%s276 + $0x38] sm:$0xff] %v291
              $region49: #{approachnet_forward.2} parent=43 // loop_footer
                %s274 = sadd.s32 1, %s270
              $region50: #{approachnet_forward.2} parent=43 // loop_footer_branch
                %269 = sbr.rel target = $region46
              $region51: #{approachnet_forward.2} parent=43 // loop_exit
                _
            $region44: #{approachnet_forward.2} parent=39 // pred_fallthru
              _
            // Predicated region
            $region52: #{approachnet_forward.2} parent=39 // pred_check
              _
            $region53: #{approachnet_forward.2} parent=39 // pred_check_branch
              %294 = sbr.rel target = $region55
            $region54: #{approachnet_forward.2} parent=39 // pred_region
              _
            $region55: #{approachnet_forward.2} parent=39 // pred_fallthru
              _
          $region40: #{approachnet_forward.2} parent=35 // pred_fallthru
            _
          %295 = vnop
        $region36: #{approachnet_forward.2} parent=31 // pred_fallthru
          _
      $region32: #{approachnet_forward.2} parent=5 // pred_fallthru
        _
      %p296 = scmp.le.s32.totalorder 1, %s14
      %p297 = scmp.lt.s32.totalorder %s14, 5
      %p298 = pnand %p296, %p297
      %p299 = pneg %p298
      // Predicated region
      $region56: #{approachnet_forward.2} parent=5 // pred_check
        _
      $region57: #{approachnet_forward.2} parent=5 // pred_check_branch
        %301 = sbr.rel (%p298) target = $region59
      $region58: #{approachnet_forward.2} parent=5 // pred_region
        %s302 = ssub.s32 %s14, 1
        %s303 = sand.u32 %s41, 1
        %s304 = sand.u32 %s41, 1
        %s305 = smul.addr %s304, 64
        %s306 = scalar_lea.vmem [#allocation2], %s305
        // Predicated region
        $region60: #{approachnet_forward.2} parent=58 // pred_check
          %p307 = pneg %p54
        $region61: #{approachnet_forward.2} parent=58 // pred_check_branch
          %309 = sbr.rel (%p307) target = $region63
        $region62: #{approachnet_forward.2} parent=58 // pred_region
          _
        $region63: #{approachnet_forward.2} parent=58 // pred_fallthru
          _
        %s310 = sand.u32 %s41, 1
        %s311 = sand.u32 %s41, 1
        %s312 = smul.addr %s311, 64
        %s313 = scalar_lea.vmem [#allocation2], %s312
        %p314 = pneg %p54
        %p315 = pneg %p51
        %p316 = pneg %p75
        %p317 = pneg %p72
        %p318 = pneg %p96
        %p319 = pneg %p93
        %p320 = pneg %p117
        %p321 = pneg %p114
        %p322 = pneg %p138
        %p323 = pneg %p135
        %p324 = pneg %p166
        %p325 = pneg %p163
        %s326 = smul.u32 4, %s24
        %p327 = scmp.lt.s32.totalorder %s23, 1
        %s328 = scalar_select %p327, %s23, 1
        %p329 = scmp.lt.s32.totalorder %s326, 7
        %s330 = scalar_select %p329, %s326, 7
        %s331 = smul.addr %s328, 8
        %s332 = sadd.s32 %s330, %s331
        %s333 = scalar_lea.vmem %s5, %s332
        %p334 = pneg %p194
        %p335 = pneg %p191
        %s336 = smul.u32 4, %s24
        %p337 = scmp.lt.s32.totalorder %s23, 1
        %s338 = scalar_select %p337, %s23, 1
        %p339 = scmp.lt.s32.totalorder %s336, 7
        %s340 = scalar_select %p339, %s336, 7
        %s341 = smul.addr %s338, 8
        %s342 = sadd.s32 %s340, %s341
        %s343 = scalar_lea.vmem %s6, %s342
        %p344 = pneg %p222
        %p345 = pneg %p219
        %s346 = smul.u32 4, %s24
        %p347 = scmp.lt.s32.totalorder %s23, 1
        %s348 = scalar_select %p347, %s23, 1
        %p349 = scmp.lt.s32.totalorder %s346, 7
        %s350 = scalar_select %p349, %s346, 7
        %s351 = smul.addr %s348, 8
        %s352 = sadd.s32 %s350, %s351
        %s353 = scalar_lea.vmem %s7, %s352
        %s354 = smul.u32 4, %s24
        %s355 = smul.u32 4, %s24
        %p356 = scmp.lt.s32.totalorder %s23, 1
        %s357 = scalar_select %p356, %s23, 1
        %p358 = scmp.lt.s32.totalorder %s355, 7
        %s359 = scalar_select %p358, %s355, 7
        %s360 = smul.addr %s357, 8
        %s361 = sadd.s32 %s359, %s360
        %s362 = scalar_lea.vmem %s5, %s361
        %s363 = smul.u32 4, %s24
        %s364 = smul.u32 4, %s24
        %p365 = scmp.lt.s32.totalorder %s23, 1
        %s366 = scalar_select %p365, %s23, 1
        %p367 = scmp.lt.s32.totalorder %s364, 7
        %s368 = scalar_select %p367, %s364, 7
        %s369 = smul.addr %s366, 8
        %s370 = sadd.s32 %s368, %s369
        %s371 = scalar_lea.vmem %s6, %s370
        %s372 = smul.u32 4, %s24
        %s373 = smul.u32 4, %s24
        %p374 = scmp.lt.s32.totalorder %s23, 1
        %s375 = scalar_select %p374, %s23, 1
        %p376 = scmp.lt.s32.totalorder %s373, 7
        %s377 = scalar_select %p376, %s373, 7
        %s378 = smul.addr %s375, 8
        %s379 = sadd.s32 %s377, %s378
        %s380 = scalar_lea.vmem %s7, %s379
        %s381 = smul.u32 4, %s24
        %v383 = vld [vmem:[%s306] sm:$0xff]
        %v384 = vld [vmem:[%s306 + $0x8] sm:$0xff]
        %v385 = vld [vmem:[%s306 + $0x10] sm:$0xff]
        %v386 = vld [vmem:[%s306 + $0x18] sm:$0xff]
        %v387 = vld [vmem:[%s306 + $0x20] sm:$0xff]
        %v388 = vld [vmem:[%s306 + $0x28] sm:$0xff]
        %v389 = vld [vmem:[%s306 + $0x30] sm:$0xff]
        %v390 = vld [vmem:[%s306 + $0x38] sm:$0xff]
        %v391 = vld [vmem:[%s1] sm:$0xf]
        %v392 = vld [vmem:[%s1 + $0x4] sm:$0xf]
        %v393 = vld [vmem:[%s1 + $0x8] sm:$0xf]
        %v394 = vld [vmem:[%s1 + $0xc] sm:$0xf]
        %v395 = vld [vmem:[%s2] sm:$0xff]
        %v396 = vld [vmem:[%s2 + $0x8] sm:$0xff]
        %v397 = vld [vmem:[%s2 + $0x10] sm:$0xff]
        %v398 = vld [vmem:[%s2 + $0x18] sm:$0xff]
        %400 = vset.pattern.permute.xlu0 0
        %401 = vperm.xlu0 %400, %v395
        %v402 = vpop.permute.xlu0 %401
        %405 = vset.pattern.permute.xlu0 0
        %406 = vperm.xlu0 %405, %v396
        %v407 = vpop.permute.xlu0 %406
        %410 = vset.pattern.permute.xlu0 0
        %411 = vperm.xlu0 %410, %v397
        %v412 = vpop.permute.xlu0 %411
        %415 = vset.pattern.permute.xlu0 0
        %416 = vperm.xlu0 %415, %v398
        %v417 = vpop.permute.xlu0 %416
        %v423 = vunpack.c.l.b16 %v391
        %v424 = vunpack.c.l.b16 %v392
        %v425 = vunpack.c.l.b16 %v393
        %v426 = vunpack.c.l.b16 %v394
        %v427 = vpack.c.b16 %v424, %v423
        %v428 = vpack.c.b16 %v426, %v425
        %v437 = vunpack.c.l.b16 %v383
        %v438 = vunpack.c.h.b16 %v383
        %v439 = vunpack.c.l.b16 %v384
        %v440 = vunpack.c.h.b16 %v384
        %v441 = vunpack.c.l.b16 %v385
        %v442 = vunpack.c.h.b16 %v385
        %v443 = vunpack.c.l.b16 %v386
        %v444 = vunpack.c.h.b16 %v386
        %v445 = vunpack.c.l.b16 %v387
        %v446 = vunpack.c.h.b16 %v387
        %v447 = vunpack.c.l.b16 %v388
        %v448 = vunpack.c.h.b16 %v388
        %v449 = vunpack.c.l.b16 %v389
        %v450 = vunpack.c.h.b16 %v389
        %v451 = vunpack.c.l.b16 %v390
        %v452 = vunpack.c.h.b16 %v390
        %v453 = vpack.c.b16 %v441, %v437
        %v454 = vpack.c.b16 %v442, %v438
        %v455 = vpack.c.b16 %v443, %v439
        %v456 = vpack.c.b16 %v444, %v440
        %v457 = vpack.c.b16 %v449, %v445
        %v458 = vpack.c.b16 %v450, %v446
        %v459 = vpack.c.b16 %v451, %v447
        %v460 = vpack.c.b16 %v452, %v448
        %vm469 = vcmask 261120
        %v471 = vsel %vm469, %v427, 0
        %v474 = vsel %vm469, %v428, 0
        %476 = vmatpush.bf16.msra.mxu0 0
        %477 = vmatpush.bf16.msra.mxu0 0
        %478 = vmatpush.bf16.msra.mxu0 0
        %479 = vmatpush.bf16.msra.mxu0 0
        %480 = vmatpush.bf16.msra.mxu0 0
        %481 = vmatpush.bf16.msra.mxu0 0
        %482 = vmatpush.bf16.msra.mxu0 %v457
        %483 = vmatpush.bf16.msra.mxu0 %v453
        %484 = vmatmul.bf16.gmra.mxu0 %v471
        %v485 = vpop.f32.mrf.mxu0
        %v486 = vadd.f32 %v402, %v485
        %v487 = vpop.f32.mrf.mxu0
        %v488 = vadd.f32 %v407, %v487
        %489 = vmatmul.bf16.gmra.mxu0 %v474
        %v490 = vpop.f32.mrf.mxu0
        %v491 = vadd.f32 %v412, %v490
        %v492 = vpop.f32.mrf.mxu0
        %v493 = vadd.f32 %v417, %v492
        %494 = vdwg.mxu0
        %495 = vmatpush.bf16.msra.mxu0 0
        %496 = vmatpush.bf16.msra.mxu0 0
        %497 = vmatpush.bf16.msra.mxu0 0
        %498 = vmatpush.bf16.msra.mxu0 0
        %499 = vmatpush.bf16.msra.mxu0 0
        %500 = vmatpush.bf16.msra.mxu0 0
        %501 = vmatpush.bf16.msra.mxu0 %v458
        %502 = vmatpush.bf16.msra.mxu0 %v454
        %503 = vmatmul.bf16.gmra.mxu0 %v471
        %v504 = vpop.f32.mrf.mxu0
        %v505 = vadd.f32 %v402, %v504
        %v506 = vpop.f32.mrf.mxu0
        %v507 = vadd.f32 %v407, %v506
        %508 = vmatmul.bf16.gmra.mxu0 %v474
        %v509 = vpop.f32.mrf.mxu0
        %v510 = vadd.f32 %v412, %v509
        %v511 = vpop.f32.mrf.mxu0
        %v512 = vadd.f32 %v417, %v511
        %513 = vdwg.mxu0
        %514 = vmatpush.bf16.msra.mxu0 0
        %515 = vmatpush.bf16.msra.mxu0 0
        %516 = vmatpush.bf16.msra.mxu0 0
        %517 = vmatpush.bf16.msra.mxu0 0
        %518 = vmatpush.bf16.msra.mxu0 0
        %519 = vmatpush.bf16.msra.mxu0 0
        %520 = vmatpush.bf16.msra.mxu0 %v459
        %521 = vmatpush.bf16.msra.mxu0 %v455
        %522 = vmatmul.bf16.gmra.mxu0 %v471
        %v523 = vpop.f32.mrf.mxu0
        %v524 = vadd.f32 %v402, %v523
        %v525 = vpop.f32.mrf.mxu0
        %v526 = vadd.f32 %v407, %v525
        %527 = vmatmul.bf16.gmra.mxu0 %v474
        %v528 = vpop.f32.mrf.mxu0
        %v529 = vadd.f32 %v412, %v528
        %v530 = vpop.f32.mrf.mxu0
        %v531 = vadd.f32 %v417, %v530
        %532 = vdwg.mxu0
        %533 = vmatpush.bf16.msra.mxu0 0
        %534 = vmatpush.bf16.msra.mxu0 0
        %535 = vmatpush.bf16.msra.mxu0 0
        %536 = vmatpush.bf16.msra.mxu0 0
        %537 = vmatpush.bf16.msra.mxu0 0
        %538 = vmatpush.bf16.msra.mxu0 0
        %539 = vmatpush.bf16.msra.mxu0 %v460
        %540 = vmatpush.bf16.msra.mxu0 %v456
        %541 = vmatmul.bf16.gmra.mxu0 %v471
        %v542 = vpop.f32.mrf.mxu0
        %v543 = vadd.f32 %v402, %v542
        %v544 = vpop.f32.mrf.mxu0
        %v545 = vadd.f32 %v407, %v544
        %546 = vmatmul.bf16.gmra.mxu0 %v474
        %v547 = vpop.f32.mrf.mxu0
        %v548 = vadd.f32 %v412, %v547
        %v549 = vpop.f32.mrf.mxu0
        %v550 = vadd.f32 %v417, %v549
        %551 = vdwg.mxu0
        %v552 = vmax.f32 %v486, 0.0
        %v553 = vmax.f32 %v505, 0.0
        %v554 = vmax.f32 %v524, 0.0
        %v555 = vmax.f32 %v543, 0.0
        %v556 = vmax.f32 %v488, 0.0
        %v557 = vmax.f32 %v507, 0.0
        %v558 = vmax.f32 %v526, 0.0
        %v559 = vmax.f32 %v545, 0.0
        %v560 = vmax.f32 %v491, 0.0
        %v561 = vmax.f32 %v510, 0.0
        %v562 = vmax.f32 %v529, 0.0
        %v563 = vmax.f32 %v548, 0.0
        %v564 = vmax.f32 %v493, 0.0
        %v565 = vmax.f32 %v512, 0.0
        %v566 = vmax.f32 %v531, 0.0
        %v567 = vmax.f32 %v550, 0.0
        %v568 = vld [vmem:[%s3] sm:$0xf]
        %v569 = vpack.c.bf16 %v556, %v552
        %v570 = vpack.c.bf16 %v557, %v553
        %v571 = vpack.c.bf16 %v558, %v554
        %v572 = vpack.c.bf16 %v559, %v555
        %v573 = vpack.c.bf16 %v564, %v560
        %v574 = vpack.c.bf16 %v565, %v561
        %v575 = vpack.c.bf16 %v566, %v562
        %v576 = vpack.c.bf16 %v567, %v563
        %v577 = vld [vmem:[%s4] sm:$0xff]
        %579 = vset.pattern.permute.xlu0 0
        %580 = vperm.xlu0 %579, %v577
        %v581 = vpop.permute.xlu0 %580
        %v584 = vsel %vm469, %v568, 0
        %586 = vmatpush.bf16.msra.mxu0 0
        %587 = vmatpush.bf16.msra.mxu0 0
        %588 = vmatpush.bf16.msra.mxu0 0
        %589 = vmatpush.bf16.msra.mxu0 0
        %590 = vmatpush.bf16.msra.mxu0 0
        %591 = vmatpush.bf16.msra.mxu0 0
        %592 = vmatpush.bf16.msra.mxu0 %v573
        %593 = vmatpush.bf16.msra.mxu0 %v569
        %594 = vmatmul.bf16.gmra.mxu0 %v584
        %v595 = vpop.f32.mrf.mxu0
        %v596 = vadd.f32 %v581, %v595
        %v597 = vpop.f32.mrf.mxu0
        %598 = vdwg.mxu0
        %599 = vmatpush.bf16.msra.mxu0 0
        %600 = vmatpush.bf16.msra.mxu0 0
        %601 = vmatpush.bf16.msra.mxu0 0
        %602 = vmatpush.bf16.msra.mxu0 0
        %603 = vmatpush.bf16.msra.mxu0 0
        %604 = vmatpush.bf16.msra.mxu0 0
        %605 = vmatpush.bf16.msra.mxu0 %v574
        %606 = vmatpush.bf16.msra.mxu0 %v570
        %607 = vmatmul.bf16.gmra.mxu0 %v584
        %v608 = vpop.f32.mrf.mxu0
        %v609 = vadd.f32 %v581, %v608
        %v610 = vpop.f32.mrf.mxu0
        %611 = vdwg.mxu0
        %612 = vmatpush.bf16.msra.mxu0 0
        %613 = vmatpush.bf16.msra.mxu0 0
        %614 = vmatpush.bf16.msra.mxu0 0
        %615 = vmatpush.bf16.msra.mxu0 0
        %616 = vmatpush.bf16.msra.mxu0 0
        %617 = vmatpush.bf16.msra.mxu0 0
        %618 = vmatpush.bf16.msra.mxu0 %v575
        %619 = vmatpush.bf16.msra.mxu0 %v571
        %620 = vmatmul.bf16.gmra.mxu0 %v584
        %v621 = vpop.f32.mrf.mxu0
        %v622 = vadd.f32 %v581, %v621
        %v623 = vpop.f32.mrf.mxu0
        %624 = vdwg.mxu0
        %625 = vmatpush.bf16.msra.mxu0 0
        %626 = vmatpush.bf16.msra.mxu0 0
        %627 = vmatpush.bf16.msra.mxu0 0
        %628 = vmatpush.bf16.msra.mxu0 0
        %629 = vmatpush.bf16.msra.mxu0 0
        %630 = vmatpush.bf16.msra.mxu0 0
        %631 = vmatpush.bf16.msra.mxu0 %v576
        %632 = vmatpush.bf16.msra.mxu0 %v572
        %633 = vmatmul.bf16.gmra.mxu0 %v584
        %v634 = vpop.f32.mrf.mxu0
        %v635 = vadd.f32 %v581, %v634
        %v636 = vpop.f32.mrf.mxu0
        %637 = vdwg.mxu0
        %v642 = vrot.slane %v596, 7
        %v643 = vrot.slane %v609, 7
        %v644 = vrot.slane %v622, 7
        %v645 = vrot.slane %v635, 7
        %vm650 = vcmp.gt.f32.partialorder %v596, %v642
        %vm651 = vcmp.gt.f32.partialorder %v609, %v643
        %vm652 = vcmp.gt.f32.partialorder %v622, %v644
        %vm653 = vcmp.gt.f32.partialorder %v635, %v645
        %vm654 = vcmp.gt.f32.partialorder %v596, 0.1
        %vm655 = vcmp.gt.f32.partialorder %v609, 0.1
        %vm656 = vcmp.gt.f32.partialorder %v622, 0.1
        %vm657 = vcmp.gt.f32.partialorder %v635, 0.1
        %v658 = vsel %vm650, 1, 0
        %v659 = vsel %vm651, 1, 0
        %v660 = vsel %vm652, 1, 0
        %v661 = vsel %vm653, 1, 0
        %v662 = vrot.slane %v658, 7
        %v663 = vrot.slane %v659, 7
        %v664 = vrot.slane %v660, 7
        %v665 = vrot.slane %v661, 7
        %vm666 = vcmp.ne.s32.totalorder %v662, 0
        %vm667 = vcmp.ne.s32.totalorder %v663, 0
        %vm668 = vcmp.ne.s32.totalorder %v664, 0
        %vm669 = vcmp.ne.s32.totalorder %v665, 0
        %vm670 = vmand %vm654, %vm666
        %vm671 = vmand %vm655, %vm667
        %vm672 = vmand %vm656, %vm668
        %vm673 = vmand %vm657, %vm669
        %674 = vst [vmem:[#allocation1] sm:$0xff] %v596
        %675 = vst [vmem:[#allocation1 + $0x9] sm:$0xff] %v609
        %676 = vst [vmem:[#allocation1 + $0x12] sm:$0xff] %v622
        %677 = vst [vmem:[#allocation1 + $0x1b] sm:$0xff] %v635
        %s678 = scalar_lea.vmem [#allocation1], 2
        %v679 = vld [vmem:[%s678] ss:$9 sm:$0xff]
        %v681 = vlaneseq
        %vm682 = vcmp.ge.s32.totalorder %v681, 0
        %vm683 = vcmp.lt.s32.totalorder %v681, 512
        %vm684 = vmand %vm682, %vm683
        %685 = vst.msk [vmem:[%s362] sm:$0xf] %vm684, %v679
        %686 = vst [vmem:[#allocation1] sm:$0xff] %v658
        %687 = vst [vmem:[#allocation1 + $0x9] sm:$0xff] %v659
        %688 = vst [vmem:[#allocation1 + $0x12] sm:$0xff] %v660
        %689 = vst [vmem:[#allocation1 + $0x1b] sm:$0xff] %v661
        %s690 = scalar_lea.vmem [#allocation1], 1
        %v691 = vld [vmem:[%s690] ss:$9 sm:$0xff]
        %692 = vst.msk [vmem:[%s371] sm:$0xf] %vm684, %v691
        %v693 = vsel %vm670, 1, 0
        %v694 = vsel %vm671, 1, 0
        %v695 = vsel %vm672, 1, 0
        %v696 = vsel %vm673, 1, 0
        %697 = vst [vmem:[#allocation1] sm:$0xff] %v693
        %698 = vst [vmem:[#allocation1 + $0x9] sm:$0xff] %v694
        %699 = vst [vmem:[#allocation1 + $0x12] sm:$0xff] %v695
        %700 = vst [vmem:[#allocation1 + $0x1b] sm:$0xff] %v696
        %s701 = scalar_lea.vmem [#allocation1], 2
        %v702 = vld [vmem:[%s701] ss:$9 sm:$0xff]
        %703 = vst.msk [vmem:[%s380] sm:$0xf] %vm684, %v702
        %s704 = smul.u32 4, %s24
        %p705 = scmp.lt.s32.totalorder %s23, 1
        %s706 = scalar_select %p705, %s23, 1
        %p707 = scmp.lt.s32.totalorder %s704, 7
        %s708 = scalar_select %p707, %s704, 7
        %s709 = smul.addr %s706, 8
        %s710 = sadd.s32 %s708, %s709
        %s711 = scalar_lea.vmem %s5, %s710
        %s712 = smul.u32 4, %s24
        %p713 = scmp.lt.s32.totalorder %s23, 1
        %s714 = scalar_select %p713, %s23, 1
        %p715 = scmp.lt.s32.totalorder %s712, 7
        %s716 = scalar_select %p715, %s712, 7
        %s717 = smul.addr %s714, 8
        %s718 = sadd.s32 %s716, %s717
        %s719 = scalar_lea.vmem %s6, %s718
        %s720 = smul.u32 4, %s24
        %p721 = scmp.lt.s32.totalorder %s23, 1
        %s722 = scalar_select %p721, %s23, 1
        %p723 = scmp.lt.s32.totalorder %s720, 7
        %s724 = scalar_select %p723, %s720, 7
        %s725 = smul.addr %s722, 8
        %s726 = sadd.s32 %s724, %s725
        %s727 = scalar_lea.vmem %s7, %s726
        // Predicated region
        $region64: #{approachnet_forward.2} parent=58 // pred_check
          %p728 = pneg %p163
        $region65: #{approachnet_forward.2} parent=58 // pred_check_branch
          %730 = sbr.rel (%p728) target = $region67
        $region66: #{approachnet_forward.2} parent=58 // pred_region
          %s731 = smul.u32 4, %s24
        $region67: #{approachnet_forward.2} parent=58 // pred_fallthru
          _
        // Predicated region
        $region68: #{approachnet_forward.2} parent=58 // pred_check
          %p732 = pneg %p191
        $region69: #{approachnet_forward.2} parent=58 // pred_check_branch
          %734 = sbr.rel (%p732) target = $region71
        $region70: #{approachnet_forward.2} parent=58 // pred_region
          %s735 = smul.u32 4, %s24
        $region71: #{approachnet_forward.2} parent=58 // pred_fallthru
          _
        // Predicated region
        $region72: #{approachnet_forward.2} parent=58 // pred_check
          %p736 = pneg %p219
        $region73: #{approachnet_forward.2} parent=58 // pred_check_branch
          %738 = sbr.rel (%p736) target = $region75
        $region74: #{approachnet_forward.2} parent=58 // pred_region
          %s739 = smul.u32 4, %s24
        $region75: #{approachnet_forward.2} parent=58 // pred_fallthru
          _
      $region59: #{approachnet_forward.2} parent=5 // pred_fallthru
        _
      %p740 = scmp.le.s32.totalorder 2, %s14
      // Predicated region
      $region76: #{approachnet_forward.2} parent=5 // pred_check
        %p741 = pneg %p740
      $region77: #{approachnet_forward.2} parent=5 // pred_check_branch
        %743 = sbr.rel (%p741) target = $region79
      $region78: #{approachnet_forward.2} parent=5 // pred_region
        %s744 = ssub.s32 %s14, 2
        // Predicated region
        $region80: #{approachnet_forward.2} parent=78 // pred_check
          %p745 = pneg %p169
        $region81: #{approachnet_forward.2} parent=78 // pred_check_branch
          %747 = sbr.rel (%p745) target = $region83
        $region82: #{approachnet_forward.2} parent=78 // pred_region
          %s748 = smul.u32 4, %s26
          %p749 = scmp.lt.s32.totalorder %s25, 1
          %s750 = scalar_select %p749, %s25, 1
          %p751 = scmp.lt.s32.totalorder %s748, 7
          %s752 = scalar_select %p751, %s748, 7
          %s753 = smul.addr %s750, 8
          %s754 = sadd.s32 %s752, %s753
          %s755 = scalar_lea.vmem %s5, %s754
        $region83: #{approachnet_forward.2} parent=78 // pred_fallthru
          _
        // Predicated region
        $region84: #{approachnet_forward.2} parent=78 // pred_check
          %p756 = pneg %p197
        $region85: #{approachnet_forward.2} parent=78 // pred_check_branch
          %758 = sbr.rel (%p756) target = $region87
        $region86: #{approachnet_forward.2} parent=78 // pred_region
          %s759 = smul.u32 4, %s26
          %p760 = scmp.lt.s32.totalorder %s25, 1
          %s761 = scalar_select %p760, %s25, 1
          %p762 = scmp.lt.s32.totalorder %s759, 7
          %s763 = scalar_select %p762, %s759, 7
          %s764 = smul.addr %s761, 8
          %s765 = sadd.s32 %s763, %s764
          %s766 = scalar_lea.vmem %s6, %s765
        $region87: #{approachnet_forward.2} parent=78 // pred_fallthru
          _
        // Predicated region
        $region88: #{approachnet_forward.2} parent=78 // pred_check
          %p767 = pneg %p225
        $region89: #{approachnet_forward.2} parent=78 // pred_check_branch
          %769 = sbr.rel (%p767) target = $region91
        $region90: #{approachnet_forward.2} parent=78 // pred_region
          %s770 = smul.u32 4, %s26
          %p771 = scmp.lt.s32.totalorder %s25, 1
          %s772 = scalar_select %p771, %s25, 1
          %p773 = scmp.lt.s32.totalorder %s770, 7
          %s774 = scalar_select %p773, %s770, 7
          %s775 = smul.addr %s772, 8
          %s776 = sadd.s32 %s774, %s775
          %s777 = scalar_lea.vmem %s7, %s776
        $region91: #{approachnet_forward.2} parent=78 // pred_fallthru
          _
      $region79: #{approachnet_forward.2} parent=5 // pred_fallthru
        _
    $region6: #{approachnet_forward.2} parent=1 // loop_footer
      %s18 = sadd.s32 1, %s14
    $region7: #{approachnet_forward.2} parent=1 // loop_footer_branch
      %13 = sbr.rel target = $region3
    $region8: #{approachnet_forward.2} parent=1 // loop_exit
      _

// kernel: approachnet_forward.3
$region0: #{approachnet_forward.3}
  #allocation0 [shape = 'u32[]', space=smem, size = 0x4, offset = 0x4, fixed_abs, tag = 'smem constant byte address 0x4 - core index']
  #allocation1 [shape = 'u32[72,128]{1,0:T(1,128)}', space=vmem, size = 0x9000, scoped, tag = 'internal scratch']
  %s0 = inlined_call_operand.vmem [shape: bf16[2,32,256], index: 0, kind: input, shape index: {}]
  %s1 = inlined_call_operand.vmem [shape: bf16[32,32], index: 1, kind: input, shape index: {}]
  %s2 = inlined_call_operand.vmem [shape: f32[32,1], index: 2, kind: input, shape index: {}]
  %s3 = inlined_call_operand.vmem [shape: bf16[16,32], index: 3, kind: input, shape index: {}]
  %s4 = inlined_call_operand.vmem [shape: f32[16,1], index: 4, kind: input, shape index: {}]
  %s5 = inlined_call_operand.vmem [shape: bf16[16,16], index: 5, kind: input, shape index: {}]
  %s6 = inlined_call_operand.vmem [shape: f32[1,16], index: 6, kind: input, shape index: {}]
  %s7 = inlined_call_operand.vmem [shape: f32[2,256,16], index: 7, kind: output, shape index: {0}]
  %s8 = inlined_call_operand.vmem [shape: f32[2,256,1], index: 8, kind: output, shape index: {1}]
  %s9 = inlined_call_operand.vmem [shape: s32[2,256,1], index: 9, kind: output, shape index: {2}]
  %10 = xla_tuple %s7, %s8, %s9
  %s11 = sld [smem:[#allocation0]]
  $region77: #{approachnet_forward.3} parent=0
    _
  %s13 = ssub.s32 1, %s11
  %s14 = scalar_select 0, %s13, %s11
  loop: start=0, step=1, limit=4
  $region2: #{approachnet_forward.3} parent=0 // loop_pre_header
    _
  $region3: #{approachnet_forward.3} parent=0 // loop_header
    %s16 = sphi 0, %s20
    %p17 = scmp.ge.s32.totalorder %s16, 4
    %s23 = sphi 0, %s35
    %s24 = sphi 0, %s31
    %s25 = sphi 0, %s23
    %s26 = sphi 0, %s24
    %s27 = sphi 0, %s25
    %s28 = sphi 0, %s26
    %s40 = sphi 0, %s42
    %s43 = sphi 0, %s40
    %s44 = sphi 0, %s43
    %s60 = sphi 0, %s44
    %s64 = sphi 0, %s64
    %s66 = sphi 0, %s64
    %s67 = sphi 0, %s66
    %s81 = sphi 0, %s67
    %s85 = sphi 0, %s85
    %s87 = sphi 0, %s85
    %s88 = sphi 0, %s87
    %s102 = sphi 0, %s88
    %s106 = sphi 0, %s106
    %s108 = sphi 0, %s106
    %s109 = sphi 0, %s108
    %s123 = sphi 0, %s109
    %s127 = sphi 0, %s127
    %s129 = sphi 0, %s127
    %s130 = sphi 0, %s129
    %s144 = sphi 0, %s130
    %s148 = sphi 0, %s148
    %s150 = sphi 0, %s148
    %s151 = sphi 0, %s150
    %s165 = sphi 0, %s151
    %s169 = sphi 0, %s169
    %s171 = sphi 0, %s169
    %s172 = sphi 0, %s171
    %s186 = sphi 0, %s172
    %s194 = sphi 0, %s196
    %s197 = sphi 0, %s194
    %s198 = sphi 0, %s197
    %s214 = sphi 0, %s198
    %s222 = sphi 0, %s224
    %s225 = sphi 0, %s222
    %s226 = sphi 0, %s225
    %s242 = sphi 0, %s226
    %s250 = sphi 0, %s252
    %s253 = sphi 0, %s250
    %s254 = sphi 0, %s253
    %s270 = sphi 0, %s254
  $region4: #{approachnet_forward.3} parent=0 // loop_header_branch
    %19 = sbr.rel (%p17) target = $region8
  $region5: #{approachnet_forward.3} parent=0 // loop_body
    %s21 = ssub.s32 %s16, 1
    %s22 = ssub.s32 %s16, 2
    %s29 = sadd.s32 1, %s24
    %p30 = scmp.ge.s32.totalorder %s29, 1
    %s31 = scalar_select %p30, 0, %s29
    %s32 = sadd.s32 1, %s23
    %s33 = scalar_select %p30, %s32, %s23
    %p34 = scmp.ge.s32.totalorder %s33, 2
    %s35 = scalar_select %p34, 0, %s33
    %s36 = ssub.s32 %s23, %s35
    %s37 = ssub.s32 %s24, %s31
    %s38 = sor.u32 %s36, %s37
    %p39 = scmp.eq.s32.totalorder %s38, 0
    %s41 = sadd.s32 %s40, 1
    %s42 = scalar_select %p39, %s40, %s41
    %p45 = pneg %p39
    %p46 = scmp.eq.s32.totalorder %s16, 1
    %p47 = por %p45, %p46
    %p48 = scmp.ne.s32.totalorder %s40, %s43
    %p49 = scmp.eq.s32.totalorder %s16, 0
    %p50 = por %p48, %p49
    %p51 = scmp.ne.s32.totalorder %s40, %s43
    %p52 = scmp.eq.s32.totalorder %s21, 1
    %p53 = por %p51, %p52
    %p54 = scmp.ne.s32.totalorder %s43, %s44
    %p55 = scmp.eq.s32.totalorder %s21, 0
    %p56 = por %p54, %p55
    %p57 = scmp.ne.s32.totalorder %s43, %s44
    %p58 = scmp.eq.s32.totalorder %s22, 1
    %p59 = por %p57, %p58
    %p61 = scmp.ne.s32.totalorder %s44, %s60
    %p62 = scmp.eq.s32.totalorder %s22, 0
    %p63 = por %p61, %p62
    %s65 = sadd.s32 %s64, 1
    %p68 = scmp.eq.s32.totalorder %s16, 1
    %p69 = scmp.ne.s32.totalorder %s64, %s66
    %p70 = scmp.eq.s32.totalorder %s16, 0
    %p71 = por %p69, %p70
    %p72 = scmp.ne.s32.totalorder %s64, %s66
    %p73 = scmp.eq.s32.totalorder %s21, 1
    %p74 = por %p72, %p73
    %p75 = scmp.ne.s32.totalorder %s66, %s67
    %p76 = scmp.eq.s32.totalorder %s21, 0
    %p77 = por %p75, %p76
    %p78 = scmp.ne.s32.totalorder %s66, %s67
    %p79 = scmp.eq.s32.totalorder %s22, 1
    %p80 = por %p78, %p79
    %p82 = scmp.ne.s32.totalorder %s67, %s81
    %p83 = scmp.eq.s32.totalorder %s22, 0
    %p84 = por %p82, %p83
    %s86 = sadd.s32 %s85, 1
    %p89 = scmp.eq.s32.totalorder %s16, 1
    %p90 = scmp.ne.s32.totalorder %s85, %s87
    %p91 = scmp.eq.s32.totalorder %s16, 0
    %p92 = por %p90, %p91
    %p93 = scmp.ne.s32.totalorder %s85, %s87
    %p94 = scmp.eq.s32.totalorder %s21, 1
    %p95 = por %p93, %p94
    %p96 = scmp.ne.s32.totalorder %s87, %s88
    %p97 = scmp.eq.s32.totalorder %s21, 0
    %p98 = por %p96, %p97
    %p99 = scmp.ne.s32.totalorder %s87, %s88
    %p100 = scmp.eq.s32.totalorder %s22, 1
    %p101 = por %p99, %p100
    %p103 = scmp.ne.s32.totalorder %s88, %s102
    %p104 = scmp.eq.s32.totalorder %s22, 0
    %p105 = por %p103, %p104
    %s107 = sadd.s32 %s106, 1
    %p110 = scmp.eq.s32.totalorder %s16, 1
    %p111 = scmp.ne.s32.totalorder %s106, %s108
    %p112 = scmp.eq.s32.totalorder %s16, 0
    %p113 = por %p111, %p112
    %p114 = scmp.ne.s32.totalorder %s106, %s108
    %p115 = scmp.eq.s32.totalorder %s21, 1
    %p116 = por %p114, %p115
    %p117 = scmp.ne.s32.totalorder %s108, %s109
    %p118 = scmp.eq.s32.totalorder %s21, 0
    %p119 = por %p117, %p118
    %p120 = scmp.ne.s32.totalorder %s108, %s109
    %p121 = scmp.eq.s32.totalorder %s22, 1
    %p122 = por %p120, %p121
    %p124 = scmp.ne.s32.totalorder %s109, %s123
    %p125 = scmp.eq.s32.totalorder %s22, 0
    %p126 = por %p124, %p125
    %s128 = sadd.s32 %s127, 1
    %p131 = scmp.eq.s32.totalorder %s16, 1
    %p132 = scmp.ne.s32.totalorder %s127, %s129
    %p133 = scmp.eq.s32.totalorder %s16, 0
    %p134 = por %p132, %p133
    %p135 = scmp.ne.s32.totalorder %s127, %s129
    %p136 = scmp.eq.s32.totalorder %s21, 1
    %p137 = por %p135, %p136
    %p138 = scmp.ne.s32.totalorder %s129, %s130
    %p139 = scmp.eq.s32.totalorder %s21, 0
    %p140 = por %p138, %p139
    %p141 = scmp.ne.s32.totalorder %s129, %s130
    %p142 = scmp.eq.s32.totalorder %s22, 1
    %p143 = por %p141, %p142
    %p145 = scmp.ne.s32.totalorder %s130, %s144
    %p146 = scmp.eq.s32.totalorder %s22, 0
    %p147 = por %p145, %p146
    %s149 = sadd.s32 %s148, 1
    %p152 = scmp.eq.s32.totalorder %s16, 1
    %p153 = scmp.ne.s32.totalorder %s148, %s150
    %p154 = scmp.eq.s32.totalorder %s16, 0
    %p155 = por %p153, %p154
    %p156 = scmp.ne.s32.totalorder %s148, %s150
    %p157 = scmp.eq.s32.totalorder %s21, 1
    %p158 = por %p156, %p157
    %p159 = scmp.ne.s32.totalorder %s150, %s151
    %p160 = scmp.eq.s32.totalorder %s21, 0
    %p161 = por %p159, %p160
    %p162 = scmp.ne.s32.totalorder %s150, %s151
    %p163 = scmp.eq.s32.totalorder %s22, 1
    %p164 = por %p162, %p163
    %p166 = scmp.ne.s32.totalorder %s151, %s165
    %p167 = scmp.eq.s32.totalorder %s22, 0
    %p168 = por %p166, %p167
    %s170 = sadd.s32 %s169, 1
    %p173 = scmp.eq.s32.totalorder %s16, 1
    %p174 = scmp.ne.s32.totalorder %s169, %s171
    %p175 = scmp.eq.s32.totalorder %s16, 0
    %p176 = por %p174, %p175
    %p177 = scmp.ne.s32.totalorder %s169, %s171
    %p178 = scmp.eq.s32.totalorder %s21, 1
    %p179 = por %p177, %p178
    %p180 = scmp.ne.s32.totalorder %s171, %s172
    %p181 = scmp.eq.s32.totalorder %s21, 0
    %p182 = por %p180, %p181
    %p183 = scmp.ne.s32.totalorder %s171, %s172
    %p184 = scmp.eq.s32.totalorder %s22, 1
    %p185 = por %p183, %p184
    %p187 = scmp.ne.s32.totalorder %s172, %s186
    %p188 = scmp.eq.s32.totalorder %s22, 0
    %p189 = por %p187, %p188
    %s190 = ssub.s32 %s23, %s35
    %s191 = ssub.s32 %s24, %s31
    %s192 = sor.u32 %s190, %s191
    %p193 = scmp.eq.s32.totalorder %s192, 0
    %s195 = sadd.s32 %s194, 1
    %s196 = scalar_select %p193, %s194, %s195
    %p199 = pneg %p193
    %p200 = scmp.eq.s32.totalorder %s16, 1
    %p201 = por %p199, %p200
    %p202 = scmp.ne.s32.totalorder %s194, %s197
    %p203 = scmp.eq.s32.totalorder %s16, 0
    %p204 = por %p202, %p203
    %p205 = scmp.ne.s32.totalorder %s194, %s197
    %p206 = scmp.eq.s32.totalorder %s21, 1
    %p207 = por %p205, %p206
    %p208 = scmp.ne.s32.totalorder %s197, %s198
    %p209 = scmp.eq.s32.totalorder %s21, 0
    %p210 = por %p208, %p209
    %p211 = scmp.ne.s32.totalorder %s197, %s198
    %p212 = scmp.eq.s32.totalorder %s22, 1
    %p213 = por %p211, %p212
    %p215 = scmp.ne.s32.totalorder %s198, %s214
    %p216 = scmp.eq.s32.totalorder %s22, 0
    %p217 = por %p215, %p216
    %s218 = ssub.s32 %s23, %s35
    %s219 = ssub.s32 %s24, %s31
    %s220 = sor.u32 %s218, %s219
    %p221 = scmp.eq.s32.totalorder %s220, 0
    %s223 = sadd.s32 %s222, 1
    %s224 = scalar_select %p221, %s222, %s223
    %p227 = pneg %p221
    %p228 = scmp.eq.s32.totalorder %s16, 1
    %p229 = por %p227, %p228
    %p230 = scmp.ne.s32.totalorder %s222, %s225
    %p231 = scmp.eq.s32.totalorder %s16, 0
    %p232 = por %p230, %p231
    %p233 = scmp.ne.s32.totalorder %s222, %s225
    %p234 = scmp.eq.s32.totalorder %s21, 1
    %p235 = por %p233, %p234
    %p236 = scmp.ne.s32.totalorder %s225, %s226
    %p237 = scmp.eq.s32.totalorder %s21, 0
    %p238 = por %p236, %p237
    %p239 = scmp.ne.s32.totalorder %s225, %s226
    %p240 = scmp.eq.s32.totalorder %s22, 1
    %p241 = por %p239, %p240
    %p243 = scmp.ne.s32.totalorder %s226, %s242
    %p244 = scmp.eq.s32.totalorder %s22, 0
    %p245 = por %p243, %p244
    %s246 = ssub.s32 %s23, %s35
    %s247 = ssub.s32 %s24, %s31
    %s248 = sor.u32 %s246, %s247
    %p249 = scmp.eq.s32.totalorder %s248, 0
    %s251 = sadd.s32 %s250, 1
    %s252 = scalar_select %p249, %s250, %s251
    %p255 = pneg %p249
    %p256 = scmp.eq.s32.totalorder %s16, 1
    %p257 = por %p255, %p256
    %p258 = scmp.ne.s32.totalorder %s250, %s253
    %p259 = scmp.eq.s32.totalorder %s16, 0
    %p260 = por %p258, %p259
    %p261 = scmp.ne.s32.totalorder %s250, %s253
    %p262 = scmp.eq.s32.totalorder %s21, 1
    %p263 = por %p261, %p262
    %p264 = scmp.ne.s32.totalorder %s253, %s254
    %p265 = scmp.eq.s32.totalorder %s21, 0
    %p266 = por %p264, %p265
    %p267 = scmp.ne.s32.totalorder %s253, %s254
    %p268 = scmp.eq.s32.totalorder %s22, 1
    %p269 = por %p267, %p268
    %p271 = scmp.ne.s32.totalorder %s254, %s270
    %p272 = scmp.eq.s32.totalorder %s22, 0
    %p273 = por %p271, %p272
    %p274 = scmp.le.s32.totalorder 1, %s16
    %p275 = scmp.lt.s32.totalorder %s16, 3
    %p276 = pnand %p274, %p275
    %p277 = pneg %p276
    // Predicated region
    $region9: #{approachnet_forward.3} parent=5 // pred_check
      _
    $region10: #{approachnet_forward.3} parent=5 // pred_check_branch
      %279 = sbr.rel (%p276) target = $region12
    $region11: #{approachnet_forward.3} parent=5 // pred_region
      %s280 = ssub.s32 %s16, 1
      // Predicated region
      $region13: #{approachnet_forward.3} parent=11 // pred_check
        %p281 = pneg %p77
      $region14: #{approachnet_forward.3} parent=11 // pred_check_branch
        %283 = sbr.rel (%p281) target = $region16
      $region15: #{approachnet_forward.3} parent=11 // pred_region
        _
      $region16: #{approachnet_forward.3} parent=11 // pred_fallthru
        _
      // Predicated region
      $region17: #{approachnet_forward.3} parent=11 // pred_check
        %p284 = pneg %p98
      $region18: #{approachnet_forward.3} parent=11 // pred_check_branch
        %286 = sbr.rel (%p284) target = $region20
      $region19: #{approachnet_forward.3} parent=11 // pred_region
        _
      $region20: #{approachnet_forward.3} parent=11 // pred_fallthru
        _
      // Predicated region
      $region21: #{approachnet_forward.3} parent=11 // pred_check
        %p287 = pneg %p119
      $region22: #{approachnet_forward.3} parent=11 // pred_check_branch
        %289 = sbr.rel (%p287) target = $region24
      $region23: #{approachnet_forward.3} parent=11 // pred_region
        _
      $region24: #{approachnet_forward.3} parent=11 // pred_fallthru
        _
      // Predicated region
      $region25: #{approachnet_forward.3} parent=11 // pred_check
        %p290 = pneg %p140
      $region26: #{approachnet_forward.3} parent=11 // pred_check_branch
        %292 = sbr.rel (%p290) target = $region28
      $region27: #{approachnet_forward.3} parent=11 // pred_region
        _
      $region28: #{approachnet_forward.3} parent=11 // pred_fallthru
        _
      // Predicated region
      $region29: #{approachnet_forward.3} parent=11 // pred_check
        %p293 = pneg %p161
      $region30: #{approachnet_forward.3} parent=11 // pred_check_branch
        %295 = sbr.rel (%p293) target = $region32
      $region31: #{approachnet_forward.3} parent=11 // pred_region
        _
      $region32: #{approachnet_forward.3} parent=11 // pred_fallthru
        _
      // Predicated region
      $region33: #{approachnet_forward.3} parent=11 // pred_check
        %p296 = pneg %p182
      $region34: #{approachnet_forward.3} parent=11 // pred_check_branch
        %298 = sbr.rel (%p296) target = $region36
      $region35: #{approachnet_forward.3} parent=11 // pred_region
        _
      $region36: #{approachnet_forward.3} parent=11 // pred_fallthru
        _
    $region12: #{approachnet_forward.3} parent=5 // pred_fallthru
      _
    %p299 = scmp.lt.s32.totalorder %s16, 2
    // Predicated region
    $region37: #{approachnet_forward.3} parent=5 // pred_check
      %p300 = pneg %p299
    $region38: #{approachnet_forward.3} parent=5 // pred_check_branch
      %302 = sbr.rel (%p300) target = $region40
    $region39: #{approachnet_forward.3} parent=5 // pred_region
      // Predicated region
      $region41: #{approachnet_forward.3} parent=39 // pred_check
        %p303 = pneg %p50
      $region42: #{approachnet_forward.3} parent=39 // pred_check_branch
        %305 = sbr.rel (%p303) target = $region44
      $region43: #{approachnet_forward.3} parent=39 // pred_region
        %s306 = smul.u32 2, %s24
        %p307 = scmp.lt.s32.totalorder %s23, 1
        %s308 = scalar_select %p307, %s23, 1
        %p309 = scmp.lt.s32.totalorder %s306, 1
        %s310 = scalar_select %p309, %s306, 1
        %s311 = smul.addr %s308, 8
        %s312 = sadd.s32 %s310, %s311
        %s313 = smul.addr %s312, 4
        %s314 = scalar_lea.vmem %s0, %s313
        %s315 = smul.u32 2, %s24
      $region44: #{approachnet_forward.3} parent=39 // pred_fallthru
        _
    $region40: #{approachnet_forward.3} parent=5 // pred_fallthru
      _
    %p316 = scmp.le.s32.totalorder 1, %s16
    %p317 = scmp.lt.s32.totalorder %s16, 3
    %p318 = pnand %p316, %p317
    %p319 = pneg %p318
    // Predicated region
    $region45: #{approachnet_forward.3} parent=5 // pred_check
      _
    $region46: #{approachnet_forward.3} parent=5 // pred_check_branch
      %321 = sbr.rel (%p318) target = $region48
    $region47: #{approachnet_forward.3} parent=5 // pred_region
      %s322 = ssub.s32 %s16, 1
      %s323 = smul.u32 2, %s26
      %p324 = scmp.lt.s32.totalorder %s25, 1
      %s325 = scalar_select %p324, %s25, 1
      %p326 = scmp.lt.s32.totalorder %s323, 1
      %s327 = scalar_select %p326, %s323, 1
      %s328 = smul.addr %s325, 8
      %s329 = sadd.s32 %s327, %s328
      %s330 = smul.addr %s329, 4
      %s331 = scalar_lea.vmem %s0, %s330
      %p332 = pneg %p56
      %p333 = pneg %p53
      %p334 = pneg %p77
      %p335 = pneg %p74
      %p336 = pneg %p98
      %p337 = pneg %p95
      %p338 = pneg %p119
      %p339 = pneg %p116
      %p340 = pneg %p140
      %p341 = pneg %p137
      %p342 = pneg %p161
      %p343 = pneg %p158
      %p344 = pneg %p182
      %p345 = pneg %p179
      %p346 = pneg %p210
      %p347 = pneg %p207
      %s348 = smul.u32 32, %s26
      %p349 = scmp.lt.s32.totalorder %s25, 1
      %s350 = scalar_select %p349, %s25, 1
      %p351 = scmp.lt.s32.totalorder %s348, 31
      %s352 = scalar_select %p351, %s348, 31
      %s353 = smul.addr %s350, 32
      %s354 = sadd.s32 %s352, %s353
      %s355 = smul.addr %s354, 8
      %s356 = scalar_lea.vmem %s7, %s355
      %p357 = pneg %p238
      %p358 = pneg %p235
      %s359 = smul.u32 32, %s26
      %p360 = scmp.lt.s32.totalorder %s25, 1
      %s361 = scalar_select %p360, %s25, 1
      %p362 = scmp.lt.s32.totalorder %s359, 31
      %s363 = scalar_select %p362, %s359, 31
      %s364 = smul.addr %s361, 32
      %s365 = sadd.s32 %s363, %s364
      %s366 = smul.addr %s365, 8
      %s367 = scalar_lea.vmem %s8, %s366
      %p368 = pneg %p266
      %p369 = pneg %p263
      %s370 = smul.u32 32, %s26
      %p371 = scmp.lt.s32.totalorder %s25, 1
      %s372 = scalar_select %p371, %s25, 1
      %p373 = scmp.lt.s32.totalorder %s370, 31
      %s374 = scalar_select %p373, %s370, 31
      %s375 = smul.addr %s372, 32
      %s376 = sadd.s32 %s374, %s375
      %s377 = smul.addr %s376, 8
      %s378 = scalar_lea.vmem %s9, %s377
      %s379 = smul.u32 2, %s26
      %p380 = scmp.lt.s32.totalorder %s25, 1
      %s381 = scalar_select %p380, %s25, 1
      %p382 = scmp.lt.s32.totalorder %s379, 1
      %s383 = scalar_select %p382, %s379, 1
      %s384 = smul.addr %s381, 8
      %s385 = sadd.s32 %s383, %s384
      %s386 = smul.addr %s385, 4
      %s387 = scalar_lea.vmem %s0, %s386
      %s388 = smul.u32 2, %s26
      %s389 = smul.u32 32, %s26
      %p390 = scmp.lt.s32.totalorder %s25, 1
      %s391 = scalar_select %p390, %s25, 1
      %p392 = scmp.lt.s32.totalorder %s389, 31
      %s393 = scalar_select %p392, %s389, 31
      %s394 = smul.addr %s391, 32
      %s395 = sadd.s32 %s393, %s394
      %s396 = smul.addr %s395, 8
      %s397 = scalar_lea.vmem %s7, %s396
      %s398 = smul.u32 32, %s26
      %s399 = smul.u32 32, %s26
      %p400 = scmp.lt.s32.totalorder %s25, 1
      %s401 = scalar_select %p400, %s25, 1
      %p402 = scmp.lt.s32.totalorder %s399, 31
      %s403 = scalar_select %p402, %s399, 31
      %s404 = smul.addr %s401, 32
      %s405 = sadd.s32 %s403, %s404
      %s406 = smul.addr %s405, 8
      %s407 = scalar_lea.vmem %s8, %s406
      %s408 = smul.u32 32, %s26
      %s409 = smul.u32 32, %s26
      %p410 = scmp.lt.s32.totalorder %s25, 1
      %s411 = scalar_select %p410, %s25, 1
      %p412 = scmp.lt.s32.totalorder %s409, 31
      %s413 = scalar_select %p412, %s409, 31
      %s414 = smul.addr %s411, 32
      %s415 = sadd.s32 %s413, %s414
      %s416 = smul.addr %s415, 8
      %s417 = scalar_lea.vmem %s9, %s416
      %s418 = smul.u32 32, %s26
      %v420 = vld [vmem:[%s387] sm:$0xff]
      %v421 = vld [vmem:[%s387 + $0x8] sm:$0xff]
      %v422 = vld [vmem:[%s387 + $0x10] sm:$0xff]
      %v423 = vld [vmem:[%s387 + $0x18] sm:$0xff]
      %v424 = vld [vmem:[%s1] sm:$0xf]
      %v425 = vld [vmem:[%s1 + $0x4] sm:$0xf]
      %v426 = vld [vmem:[%s1 + $0x8] sm:$0xf]
      %v427 = vld [vmem:[%s1 + $0xc] sm:$0xf]
      %v428 = vld [vmem:[%s2] sm:$0xff]
      %v429 = vld [vmem:[%s2 + $0x8] sm:$0xff]
      %v430 = vld [vmem:[%s2 + $0x10] sm:$0xff]
      %v431 = vld [vmem:[%s2 + $0x18] sm:$0xff]
      %433 = vset.pattern.permute.xlu0 0
      %434 = vperm.xlu0 %433, %v428
      %v435 = vpop.permute.xlu0 %434
      %438 = vset.pattern.permute.xlu0 0
      %439 = vperm.xlu0 %438, %v429
      %v440 = vpop.permute.xlu0 %439
      %443 = vset.pattern.permute.xlu0 0
      %444 = vperm.xlu0 %443, %v430
      %v445 = vpop.permute.xlu0 %444
      %448 = vset.pattern.permute.xlu0 0
      %449 = vperm.xlu0 %448, %v431
      %v450 = vpop.permute.xlu0 %449
      %v456 = vunpack.c.l.b16 %v424
      %v457 = vunpack.c.l.b16 %v425
      %v458 = vunpack.c.l.b16 %v426
      %v459 = vunpack.c.l.b16 %v427
      %v460 = vpack.c.b16 %v457, %v456
      %v461 = vpack.c.b16 %v459, %v458
      %v466 = vunpack.c.l.b16 %v420
      %v467 = vunpack.c.h.b16 %v420
      %v468 = vunpack.c.l.b16 %v421
      %v469 = vunpack.c.h.b16 %v421
      %v470 = vunpack.c.l.b16 %v422
      %v471 = vunpack.c.h.b16 %v422
      %v472 = vunpack.c.l.b16 %v423
      %v473 = vunpack.c.h.b16 %v423
      %v474 = vpack.c.b16 %v468, %v466
      %v475 = vpack.c.b16 %v469, %v467
      %v476 = vpack.c.b16 %v472, %v470
      %v477 = vpack.c.b16 %v473, %v471
      %vm482 = vcmask 261120
      %v484 = vsel %vm482, %v460, 0
      %v487 = vsel %vm482, %v461, 0
      %489 = vmatpush.bf16.msra.mxu0 0
      %490 = vmatpush.bf16.msra.mxu0 0
      %491 = vmatpush.bf16.msra.mxu0 0
      %492 = vmatpush.bf16.msra.mxu0 0
      %493 = vmatpush.bf16.msra.mxu0 0
      %494 = vmatpush.bf16.msra.mxu0 0
      %495 = vmatpush.bf16.msra.mxu0 %v476
      %496 = vmatpush.bf16.msra.mxu0 %v474
      %497 = vmatmul.bf16.gmra.mxu0 %v484
      %v498 = vpop.f32.mrf.mxu0
      %v499 = vadd.f32 %v435, %v498
      %v500 = vpop.f32.mrf.mxu0
      %v501 = vadd.f32 %v440, %v500
      %502 = vmatmul.bf16.gmra.mxu0 %v487
      %v503 = vpop.f32.mrf.mxu0
      %v504 = vadd.f32 %v445, %v503
      %v505 = vpop.f32.mrf.mxu0
      %v506 = vadd.f32 %v450, %v505
      %507 = vdwg.mxu0
      %508 = vmatpush.bf16.msra.mxu0 0
      %509 = vmatpush.bf16.msra.mxu0 0
      %510 = vmatpush.bf16.msra.mxu0 0
      %511 = vmatpush.bf16.msra.mxu0 0
      %512 = vmatpush.bf16.msra.mxu0 0
      %513 = vmatpush.bf16.msra.mxu0 0
      %514 = vmatpush.bf16.msra.mxu0 %v477
      %515 = vmatpush.bf16.msra.mxu0 %v475
      %516 = vmatmul.bf16.gmra.mxu0 %v484
      %v517 = vpop.f32.mrf.mxu0
      %v518 = vadd.f32 %v435, %v517
      %v519 = vpop.f32.mrf.mxu0
      %v520 = vadd.f32 %v440, %v519
      %521 = vmatmul.bf16.gmra.mxu0 %v487
      %v522 = vpop.f32.mrf.mxu0
      %v523 = vadd.f32 %v445, %v522
      %v524 = vpop.f32.mrf.mxu0
      %v525 = vadd.f32 %v450, %v524
      %526 = vdwg.mxu0
      %v527 = vmax.f32 %v499, 0.0
      %v528 = vmax.f32 %v518, 0.0
      %v529 = vmax.f32 %v501, 0.0
      %v530 = vmax.f32 %v520, 0.0
      %v531 = vmax.f32 %v504, 0.0
      %v532 = vmax.f32 %v523, 0.0
      %v533 = vmax.f32 %v506, 0.0
      %v534 = vmax.f32 %v525, 0.0
      %v535 = vld [vmem:[%s3] sm:$0xf]
      %v536 = vld [vmem:[%s3 + $0x4] sm:$0xf]
      %v537 = vpack.c.bf16 %v529, %v527
      %v538 = vpack.c.bf16 %v530, %v528
      %v539 = vpack.c.bf16 %v533, %v531
      %v540 = vpack.c.bf16 %v534, %v532
      %v541 = vld [vmem:[%s4] sm:$0xff]
      %v542 = vld [vmem:[%s4 + $0x8] sm:$0xff]
      %544 = vset.pattern.permute.xlu0 0
      %545 = vperm.xlu0 %544, %v541
      %v546 = vpop.permute.xlu0 %545
      %549 = vset.pattern.permute.xlu0 0
      %550 = vperm.xlu0 %549, %v542
      %v551 = vpop.permute.xlu0 %550
      %v555 = vunpack.c.l.b16 %v535
      %v556 = vunpack.c.l.b16 %v536
      %v557 = vpack.c.b16 %v556, %v555
      %v559 = vsel %vm482, %v557, 0
      %561 = vmatpush.bf16.msra.mxu0 0
      %562 = vmatpush.bf16.msra.mxu0 0
      %563 = vmatpush.bf16.msra.mxu0 0
      %564 = vmatpush.bf16.msra.mxu0 0
      %565 = vmatpush.bf16.msra.mxu0 0
      %566 = vmatpush.bf16.msra.mxu0 0
      %567 = vmatpush.bf16.msra.mxu0 %v539
      %568 = vmatpush.bf16.msra.mxu0 %v537
      %569 = vmatmul.bf16.gmra.mxu0 %v559
      %v570 = vpop.f32.mrf.mxu0
      %v571 = vadd.f32 %v546, %v570
      %v572 = vpop.f32.mrf.mxu0
      %v573 = vadd.f32 %v551, %v572
      %574 = vdwg.mxu0
      %575 = vmatpush.bf16.msra.mxu0 0
      %576 = vmatpush.bf16.msra.mxu0 0
      %577 = vmatpush.bf16.msra.mxu0 0
      %578 = vmatpush.bf16.msra.mxu0 0
      %579 = vmatpush.bf16.msra.mxu0 0
      %580 = vmatpush.bf16.msra.mxu0 0
      %581 = vmatpush.bf16.msra.mxu0 %v540
      %582 = vmatpush.bf16.msra.mxu0 %v538
      %583 = vmatmul.bf16.gmra.mxu0 %v559
      %v584 = vpop.f32.mrf.mxu0
      %v585 = vadd.f32 %v546, %v584
      %v586 = vpop.f32.mrf.mxu0
      %v587 = vadd.f32 %v551, %v586
      %588 = vdwg.mxu0
      %v589 = vmax.f32 %v571, 0.0
      %v590 = vmax.f32 %v585, 0.0
      %v591 = vmax.f32 %v573, 0.0
      %v592 = vmax.f32 %v587, 0.0
      %v593 = vpack.c.bf16 %v591, %v589
      %v594 = vpack.c.bf16 %v592, %v590
      %v595 = vld [vmem:[%s5] sm:$0xf]
      %v596 = vld [vmem:[%s5 + $0x4] sm:$0xf]
      %v597 = vld [vmem:[%s6] sm:$0x1]
      %v599 = vperm.slane %v597, 0
      %601 = vxpose.binary.xlu0.c.b16.start [1/16] %v594, %v593, 128
      %602 = vxpose.binary.xlu0.c.b16.cont [2/16] 0, 0, 128
      %603 = vxpose.binary.xlu0.c.b16.cont [3/16] 0, 0, 128
      %604 = vxpose.binary.xlu0.c.b16.cont [4/16] 0, 0, 128
      %605 = vxpose.binary.xlu0.c.b16.cont [5/16] 0, 0, 128
      %606 = vxpose.binary.xlu0.c.b16.cont [6/16] 0, 0, 128
      %607 = vxpose.binary.xlu0.c.b16.cont [7/16] 0, 0, 128
      %608 = vxpose.binary.xlu0.c.b16.end [8/16] 0, 0, 128
      %v609 = vpop.trf.xlu0
      %v610 = vpop.trf.xlu0
      %v611 = vpop.trf.xlu0
      %v612 = vpop.trf.xlu0
      %v613 = vpop.trf.xlu0
      %v614 = vpop.trf.xlu0
      %v615 = vpop.trf.xlu0
      %v616 = vpop.trf.xlu0
      %v617 = vpop.trf.xlu0
      %v618 = vpop.trf.xlu0
      %v619 = vpop.trf.xlu0
      %v620 = vpop.trf.xlu0
      %v621 = vpop.trf.xlu0
      %v622 = vpop.trf.xlu0
      %v623 = vpop.trf.xlu0
      %v624 = vpop.trf.xlu0
      %v627 = vunpack.c.l.b16 %v595
      %v628 = vunpack.c.l.b16 %v596
      %v629 = vpack.c.b16 %v628, %v627
      %vm631 = vcmask 130048
      %v633 = vsel %vm631, %v609, 0
      %v636 = vsel %vm631, %v611, 0
      %v639 = vsel %vm631, %v613, 0
      %v642 = vsel %vm631, %v615, 0
      %v645 = vsel %vm631, %v617, 0
      %v648 = vsel %vm631, %v619, 0
      %v651 = vsel %vm631, %v621, 0
      %v654 = vsel %vm631, %v623, 0
      %v657 = vsel %vm631, %v610, 0
      %v660 = vsel %vm631, %v612, 0
      %v663 = vsel %vm631, %v614, 0
      %v666 = vsel %vm631, %v616, 0
      %v669 = vsel %vm631, %v618, 0
      %v672 = vsel %vm631, %v620, 0
      %v675 = vsel %vm631, %v622, 0
      %v678 = vsel %vm631, %v624, 0
      %680 = vmatpush.bf16.msra.mxu0 0
      %681 = vmatpush.bf16.msra.mxu0 0
      %682 = vmatpush.bf16.msra.mxu0 0
      %683 = vmatpush.bf16.msra.mxu0 0
      %684 = vmatpush.bf16.msra.mxu0 0
      %685 = vmatpush.bf16.msra.mxu0 0
      %686 = vmatpush.bf16.msra.mxu0 0
      %687 = vmatpush.bf16.msra.mxu0 %v629
      %688 = vmatmul.bf16.gmra.mxu0 %v633
      %v689 = vpop.f32.mrf.mxu0
      %v690 = vadd.f32 %v599, %v689
      %v691 = vpop.f32.mrf.mxu0
      %v692 = vadd.f32 %v599, %v691
      %693 = vmatmul.bf16.gmra.mxu0 %v636
      %v694 = vpop.f32.mrf.mxu0
      %v695 = vadd.f32 %v599, %v694
      %v696 = vpop.f32.mrf.mxu0
      %v697 = vadd.f32 %v599, %v696
      %698 = vmatmul.bf16.gmra.mxu0 %v639
      %v699 = vpop.f32.mrf.mxu0
      %v700 = vadd.f32 %v599, %v699
      %v701 = vpop.f32.mrf.mxu0
      %v702 = vadd.f32 %v599, %v701
      %703 = vmatmul.bf16.gmra.mxu0 %v642
      %v704 = vpop.f32.mrf.mxu0
      %v705 = vadd.f32 %v599, %v704
      %v706 = vpop.f32.mrf.mxu0
      %v707 = vadd.f32 %v599, %v706
      %708 = vmatmul.bf16.gmra.mxu0 %v645
      %v709 = vpop.f32.mrf.mxu0
      %v710 = vadd.f32 %v599, %v709
      %v711 = vpop.f32.mrf.mxu0
      %v712 = vadd.f32 %v599, %v711
      %713 = vmatmul.bf16.gmra.mxu0 %v648
      %v714 = vpop.f32.mrf.mxu0
      %v715 = vadd.f32 %v599, %v714
      %v716 = vpop.f32.mrf.mxu0
      %v717 = vadd.f32 %v599, %v716
      %718 = vmatmul.bf16.gmra.mxu0 %v651
      %v719 = vpop.f32.mrf.mxu0
      %v720 = vadd.f32 %v599, %v719
      %v721 = vpop.f32.mrf.mxu0
      %v722 = vadd.f32 %v599, %v721
      %723 = vmatmul.bf16.gmra.mxu0 %v654
      %v724 = vpop.f32.mrf.mxu0
      %v725 = vadd.f32 %v599, %v724
      %v726 = vpop.f32.mrf.mxu0
      %v727 = vadd.f32 %v599, %v726
      %728 = vmatmul.bf16.gmra.mxu0 %v657
      %v729 = vpop.f32.mrf.mxu0
      %v730 = vadd.f32 %v599, %v729
      %v731 = vpop.f32.mrf.mxu0
      %v732 = vadd.f32 %v599, %v731
      %733 = vmatmul.bf16.gmra.mxu0 %v660
      %v734 = vpop.f32.mrf.mxu0
      %v735 = vadd.f32 %v599, %v734
      %v736 = vpop.f32.mrf.mxu0
      %v737 = vadd.f32 %v599, %v736
      %738 = vmatmul.bf16.gmra.mxu0 %v663
      %v739 = vpop.f32.mrf.mxu0
      %v740 = vadd.f32 %v599, %v739
      %v741 = vpop.f32.mrf.mxu0
      %v742 = vadd.f32 %v599, %v741
      %743 = vmatmul.bf16.gmra.mxu0 %v666
      %v744 = vpop.f32.mrf.mxu0
      %v745 = vadd.f32 %v599, %v744
      %v746 = vpop.f32.mrf.mxu0
      %v747 = vadd.f32 %v599, %v746
      %748 = vmatmul.bf16.gmra.mxu0 %v669
      %v749 = vpop.f32.mrf.mxu0
      %v750 = vadd.f32 %v599, %v749
      %v751 = vpop.f32.mrf.mxu0
      %v752 = vadd.f32 %v599, %v751
      %753 = vmatmul.bf16.gmra.mxu0 %v672
      %v754 = vpop.f32.mrf.mxu0
      %v755 = vadd.f32 %v599, %v754
      %v756 = vpop.f32.mrf.mxu0
      %v757 = vadd.f32 %v599, %v756
      %758 = vmatmul.bf16.gmra.mxu0 %v675
      %v759 = vpop.f32.mrf.mxu0
      %v760 = vadd.f32 %v599, %v759
      %v761 = vpop.f32.mrf.mxu0
      %v762 = vadd.f32 %v599, %v761
      %763 = vmatmul.bf16.gmra.mxu0 %v678
      %v764 = vpop.f32.mrf.mxu0
      %v765 = vadd.f32 %v599, %v764
      %v766 = vpop.f32.mrf.mxu0
      %v767 = vadd.f32 %v599, %v766
      %768 = vdwg.mxu0
      %769 = vst.msk [vmem:[%s397] sm:$0xff] %vm631, %v690
      %770 = vst.msk [vmem:[%s397 + $0x8] sm:$0xff] %vm631, %v692
      %771 = vst.msk [vmem:[%s397 + $0x10] sm:$0xff] %vm631, %v695
      %772 = vst.msk [vmem:[%s397 + $0x18] sm:$0xff] %vm631, %v697
      %773 = vst.msk [vmem:[%s397 + $0x20] sm:$0xff] %vm631, %v700
      %774 = vst.msk [vmem:[%s397 + $0x28] sm:$0xff] %vm631, %v702
      %775 = vst.msk [vmem:[%s397 + $0x30] sm:$0xff] %vm631, %v705
      %776 = vst.msk [vmem:[%s397 + $0x38] sm:$0xff] %vm631, %v707
      %777 = vst.msk [vmem:[%s397 + $0x40] sm:$0xff] %vm631, %v710
      %778 = vst.msk [vmem:[%s397 + $0x48] sm:$0xff] %vm631, %v712
      %779 = vst.msk [vmem:[%s397 + $0x50] sm:$0xff] %vm631, %v715
      %780 = vst.msk [vmem:[%s397 + $0x58] sm:$0xff] %vm631, %v717
      %781 = vst.msk [vmem:[%s397 + $0x60] sm:$0xff] %vm631, %v720
      %782 = vst.msk [vmem:[%s397 + $0x68] sm:$0xff] %vm631, %v722
      %783 = vst.msk [vmem:[%s397 + $0x70] sm:$0xff] %vm631, %v725
      %784 = vst.msk [vmem:[%s397 + $0x78] sm:$0xff] %vm631, %v727
      %785 = vst.msk [vmem:[%s397 + $0x80] sm:$0xff] %vm631, %v730
      %786 = vst.msk [vmem:[%s397 + $0x88] sm:$0xff] %vm631, %v732
      %787 = vst.msk [vmem:[%s397 + $0x90] sm:$0xff] %vm631, %v735
      %788 = vst.msk [vmem:[%s397 + $0x98] sm:$0xff] %vm631, %v737
      %789 = vst.msk [vmem:[%s397 + $0xa0] sm:$0xff] %vm631, %v740
      %790 = vst.msk [vmem:[%s397 + $0xa8] sm:$0xff] %vm631, %v742
      %791 = vst.msk [vmem:[%s397 + $0xb0] sm:$0xff] %vm631, %v745
      %792 = vst.msk [vmem:[%s397 + $0xb8] sm:$0xff] %vm631, %v747
      %793 = vst.msk [vmem:[%s397 + $0xc0] sm:$0xff] %vm631, %v750
      %794 = vst.msk [vmem:[%s397 + $0xc8] sm:$0xff] %vm631, %v752
      %795 = vst.msk [vmem:[%s397 + $0xd0] sm:$0xff] %vm631, %v755
      %796 = vst.msk [vmem:[%s397 + $0xd8] sm:$0xff] %vm631, %v757
      %797 = vst.msk [vmem:[%s397 + $0xe0] sm:$0xff] %vm631, %v760
      %798 = vst.msk [vmem:[%s397 + $0xe8] sm:$0xff] %vm631, %v762
      %799 = vst.msk [vmem:[%s397 + $0xf0] sm:$0xff] %vm631, %v765
      %800 = vst.msk [vmem:[%s397 + $0xf8] sm:$0xff] %vm631, %v767
      %v801 = vsel %vm631, %v690, -inf
      %802 = vmax.xlane.f32.xlu0 %v801
      %v803 = vpop.xlane.xlu0 %802
      %v804 = vsel %vm631, %v692, -inf
      %805 = vmax.xlane.f32.xlu0 %v804
      %v806 = vpop.xlane.xlu0 %805
      %v807 = vsel %vm631, %v695, -inf
      %808 = vmax.xlane.f32.xlu0 %v807
      %v809 = vpop.xlane.xlu0 %808
      %v810 = vsel %vm631, %v697, -inf
      %811 = vmax.xlane.f32.xlu0 %v810
      %v812 = vpop.xlane.xlu0 %811
      %v813 = vsel %vm631, %v700, -inf
      %814 = vmax.xlane.f32.xlu0 %v813
      %v815 = vpop.xlane.xlu0 %814
      %v816 = vsel %vm631, %v702, -inf
      %817 = vmax.xlane.f32.xlu0 %v816
      %v818 = vpop.xlane.xlu0 %817
      %v819 = vsel %vm631, %v705, -inf
      %820 = vmax.xlane.f32.xlu0 %v819
      %v821 = vpop.xlane.xlu0 %820
      %v822 = vsel %vm631, %v707, -inf
      %823 = vmax.xlane.f32.xlu0 %v822
      %v824 = vpop.xlane.xlu0 %823
      %v825 = vsel %vm631, %v710, -inf
      %826 = vmax.xlane.f32.xlu0 %v825
      %v827 = vpop.xlane.xlu0 %826
      %v828 = vsel %vm631, %v712, -inf
      %829 = vmax.xlane.f32.xlu0 %v828
      %v830 = vpop.xlane.xlu0 %829
      %v831 = vsel %vm631, %v715, -inf
      %832 = vmax.xlane.f32.xlu0 %v831
      %v833 = vpop.xlane.xlu0 %832
      %v834 = vsel %vm631, %v717, -inf
      %835 = vmax.xlane.f32.xlu0 %v834
      %v836 = vpop.xlane.xlu0 %835
      %v837 = vsel %vm631, %v720, -inf
      %838 = vmax.xlane.f32.xlu0 %v837
      %v839 = vpop.xlane.xlu0 %838
      %v840 = vsel %vm631, %v722, -inf
      %841 = vmax.xlane.f32.xlu0 %v840
      %v842 = vpop.xlane.xlu0 %841
      %v843 = vsel %vm631, %v725, -inf
      %844 = vmax.xlane.f32.xlu0 %v843
      %v845 = vpop.xlane.xlu0 %844
      %v846 = vsel %vm631, %v727, -inf
      %847 = vmax.xlane.f32.xlu0 %v846
      %v848 = vpop.xlane.xlu0 %847
      %v849 = vsel %vm631, %v730, -inf
      %850 = vmax.xlane.f32.xlu0 %v849
      %v851 = vpop.xlane.xlu0 %850
      %v852 = vsel %vm631, %v732, -inf
      %853 = vmax.xlane.f32.xlu0 %v852
      %v854 = vpop.xlane.xlu0 %853
      %v855 = vsel %vm631, %v735, -inf
      %856 = vmax.xlane.f32.xlu0 %v855
      %v857 = vpop.xlane.xlu0 %856
      %v858 = vsel %vm631, %v737, -inf
      %859 = vmax.xlane.f32.xlu0 %v858
      %v860 = vpop.xlane.xlu0 %859
      %v861 = vsel %vm631, %v740, -inf
      %862 = vmax.xlane.f32.xlu0 %v861
      %v863 = vpop.xlane.xlu0 %862
      %v864 = vsel %vm631, %v742, -inf
      %865 = vmax.xlane.f32.xlu0 %v864
      %v866 = vpop.xlane.xlu0 %865
      %v867 = vsel %vm631, %v745, -inf
      %868 = vmax.xlane.f32.xlu0 %v867
      %v869 = vpop.xlane.xlu0 %868
      %v870 = vsel %vm631, %v747, -inf
      %871 = vmax.xlane.f32.xlu0 %v870
      %v872 = vpop.xlane.xlu0 %871
      %v873 = vsel %vm631, %v750, -inf
      %874 = vmax.xlane.f32.xlu0 %v873
      %v875 = vpop.xlane.xlu0 %874
      %v876 = vsel %vm631, %v752, -inf
      %877 = vmax.xlane.f32.xlu0 %v876
      %v878 = vpop.xlane.xlu0 %877
      %v879 = vsel %vm631, %v755, -inf
      %880 = vmax.xlane.f32.xlu0 %v879
      %v881 = vpop.xlane.xlu0 %880
      %v882 = vsel %vm631, %v757, -inf
      %883 = vmax.xlane.f32.xlu0 %v882
      %v884 = vpop.xlane.xlu0 %883
      %v885 = vsel %vm631, %v760, -inf
      %886 = vmax.xlane.f32.xlu0 %v885
      %v887 = vpop.xlane.xlu0 %886
      %v888 = vsel %vm631, %v762, -inf
      %889 = vmax.xlane.f32.xlu0 %v888
      %v890 = vpop.xlane.xlu0 %889
      %v891 = vsel %vm631, %v765, -inf
      %892 = vmax.xlane.f32.xlu0 %v891
      %v893 = vpop.xlane.xlu0 %892
      %v894 = vsel %vm631, %v767, -inf
      %895 = vmax.xlane.f32.xlu0 %v894
      %v896 = vpop.xlane.xlu0 %895
      %v897 = vlaneseq
      %v898 = vand.u32 %v897, 127
      %vm899 = vcmp.eq.f32.partialorder %v690, %v803
      %vm900 = vcmp.eq.f32.partialorder %v692, %v806
      %vm901 = vcmp.eq.f32.partialorder %v695, %v809
      %vm902 = vcmp.eq.f32.partialorder %v697, %v812
      %vm903 = vcmp.eq.f32.partialorder %v700, %v815
      %vm904 = vcmp.eq.f32.partialorder %v702, %v818
      %vm905 = vcmp.eq.f32.partialorder %v705, %v821
      %vm906 = vcmp.eq.f32.partialorder %v707, %v824
      %vm907 = vcmp.eq.f32.partialorder %v710, %v827
      %vm908 = vcmp.eq.f32.partialorder %v712, %v830
      %vm909 = vcmp.eq.f32.partialorder %v715, %v833
      %vm910 = vcmp.eq.f32.partialorder %v717, %v836
      %vm911 = vcmp.eq.f32.partialorder %v720, %v839
      %vm912 = vcmp.eq.f32.partialorder %v722, %v842
      %vm913 = vcmp.eq.f32.partialorder %v725, %v845
      %vm914 = vcmp.eq.f32.partialorder %v727, %v848
      %vm915 = vcmp.eq.f32.partialorder %v730, %v851
      %vm916 = vcmp.eq.f32.partialorder %v732, %v854
      %vm917 = vcmp.eq.f32.partialorder %v735, %v857
      %vm918 = vcmp.eq.f32.partialorder %v737, %v860
      %vm919 = vcmp.eq.f32.partialorder %v740, %v863
      %vm920 = vcmp.eq.f32.partialorder %v742, %v866
      %vm921 = vcmp.eq.f32.partialorder %v745, %v869
      %vm922 = vcmp.eq.f32.partialorder %v747, %v872
      %vm923 = vcmp.eq.f32.partialorder %v750, %v875
      %vm924 = vcmp.eq.f32.partialorder %v752, %v878
      %vm925 = vcmp.eq.f32.partialorder %v755, %v881
      %vm926 = vcmp.eq.f32.partialorder %v757, %v884
      %vm927 = vcmp.eq.f32.partialorder %v760, %v887
      %vm928 = vcmp.eq.f32.partialorder %v762, %v890
      %vm929 = vcmp.eq.f32.partialorder %v765, %v893
      %vm930 = vcmp.eq.f32.partialorder %v767, %v896
      %v931 = vsel %vm899, %v898, 16
      %v932 = vsel %vm900, %v898, 16
      %v933 = vsel %vm901, %v898, 16
      %v934 = vsel %vm902, %v898, 16
      %v935 = vsel %vm903, %v898, 16
      %v936 = vsel %vm904, %v898, 16
      %v937 = vsel %vm905, %v898, 16
      %v938 = vsel %vm906, %v898, 16
      %v939 = vsel %vm907, %v898, 16
      %v940 = vsel %vm908, %v898, 16
      %v941 = vsel %vm909, %v898, 16
      %v942 = vsel %vm910, %v898, 16
      %v943 = vsel %vm911, %v898, 16
      %v944 = vsel %vm912, %v898, 16
      %v945 = vsel %vm913, %v898, 16
      %v946 = vsel %vm914, %v898, 16
      %v947 = vsel %vm915, %v898, 16
      %v948 = vsel %vm916, %v898, 16
      %v949 = vsel %vm917, %v898, 16
      %v950 = vsel %vm918, %v898, 16
      %v951 = vsel %vm919, %v898, 16
      %v952 = vsel %vm920, %v898, 16
      %v953 = vsel %vm921, %v898, 16
      %v954 = vsel %vm922, %v898, 16
      %v955 = vsel %vm923, %v898, 16
      %v956 = vsel %vm924, %v898, 16
      %v957 = vsel %vm925, %v898, 16
      %v958 = vsel %vm926, %v898, 16
      %v959 = vsel %vm927, %v898, 16
      %v960 = vsel %vm928, %v898, 16
      %v961 = vsel %vm929, %v898, 16
      %v962 = vsel %vm930, %v898, 16
      %v963 = vsel %vm631, %v931, 2147483647
      %v964 = vand.u32 %v963, 65535
      %v965 = vshra.s32 %v963, 16
      %v966 = vcvt.s32.f32 %v964
      %v967 = vcvt.s32.f32 %v965
      %968 = vmin.xlane.f32.xlu0 %v967
      %v969 = vpop.xlane.xlu0 %968
      %vm970 = vcmp.eq.f32.partialorder %v967, %v969
      %v971 = vsel %vm970, %v966, inf
      %972 = vmin.xlane.f32.xlu0 %v971
      %v973 = vpop.xlane.xlu0 %972
      %v974 = vcvt.f32.s32 %v973
      %v975 = vcvt.f32.s32 %v969
      %v976 = vshll.u32 %v975, 16
      %v977 = vadd.s32 %v976, %v974
      %v978 = vsel %vm631, %v932, 2147483647
      %v979 = vand.u32 %v978, 65535
      %v980 = vshra.s32 %v978, 16
      %v981 = vcvt.s32.f32 %v979
      %v982 = vcvt.s32.f32 %v980
      %983 = vmin.xlane.f32.xlu0 %v982
      %v984 = vpop.xlane.xlu0 %983
      %vm985 = vcmp.eq.f32.partialorder %v982, %v984
      %v986 = vsel %vm985, %v981, inf
      %987 = vmin.xlane.f32.xlu0 %v986
      %v988 = vpop.xlane.xlu0 %987
      %v989 = vcvt.f32.s32 %v988
      %v990 = vcvt.f32.s32 %v984
      %v991 = vshll.u32 %v990, 16
      %v992 = vadd.s32 %v991, %v989
      %v993 = vsel %vm631, %v933, 2147483647
      %v994 = vand.u32 %v993, 65535
      %v995 = vshra.s32 %v993, 16
      %v996 = vcvt.s32.f32 %v994
      %v997 = vcvt.s32.f32 %v995
      %998 = vmin.xlane.f32.xlu0 %v997
      %v999 = vpop.xlane.xlu0 %998
      %vm1000 = vcmp.eq.f32.partialorder %v997, %v999
      %v1001 = vsel %vm1000, %v996, inf
      %1002 = vmin.xlane.f32.xlu0 %v1001
      %v1003 = vpop.xlane.xlu0 %1002
      %v1004 = vcvt.f32.s32 %v1003
      %v1005 = vcvt.f32.s32 %v999
      %v1006 = vshll.u32 %v1005, 16
      %v1007 = vadd.s32 %v1006, %v1004
      %v1008 = vsel %vm631, %v934, 2147483647
      %v1009 = vand.u32 %v1008, 65535
      %v1010 = vshra.s32 %v1008, 16
      %v1011 = vcvt.s32.f32 %v1009
      %v1012 = vcvt.s32.f32 %v1010
      %1013 = vmin.xlane.f32.xlu0 %v1012
      %v1014 = vpop.xlane.xlu0 %1013
      %vm1015 = vcmp.eq.f32.partialorder %v1012, %v1014
      %v1016 = vsel %vm1015, %v1011, inf
      %1017 = vmin.xlane.f32.xlu0 %v1016
      %v1018 = vpop.xlane.xlu0 %1017
      %v1019 = vcvt.f32.s32 %v1018
      %v1020 = vcvt.f32.s32 %v1014
      %v1021 = vshll.u32 %v1020, 16
      %v1022 = vadd.s32 %v1021, %v1019
      %v1023 = vsel %vm631, %v935, 2147483647
      %v1024 = vand.u32 %v1023, 65535
      %v1025 = vshra.s32 %v1023, 16
      %v1026 = vcvt.s32.f32 %v1024
      %v1027 = vcvt.s32.f32 %v1025
      %1028 = vmin.xlane.f32.xlu0 %v1027
      %v1029 = vpop.xlane.xlu0 %1028
      %vm1030 = vcmp.eq.f32.partialorder %v1027, %v1029
      %v1031 = vsel %vm1030, %v1026, inf
      %1032 = vmin.xlane.f32.xlu0 %v1031
      %v1033 = vpop.xlane.xlu0 %1032
      %v1034 = vcvt.f32.s32 %v1033
      %v1035 = vcvt.f32.s32 %v1029
      %v1036 = vshll.u32 %v1035, 16
      %v1037 = vadd.s32 %v1036, %v1034
      %v1038 = vsel %vm631, %v936, 2147483647
      %v1039 = vand.u32 %v1038, 65535
      %v1040 = vshra.s32 %v1038, 16
      %v1041 = vcvt.s32.f32 %v1039
      %v1042 = vcvt.s32.f32 %v1040
      %1043 = vmin.xlane.f32.xlu0 %v1042
      %v1044 = vpop.xlane.xlu0 %1043
      %vm1045 = vcmp.eq.f32.partialorder %v1042, %v1044
      %v1046 = vsel %vm1045, %v1041, inf
      %1047 = vmin.xlane.f32.xlu0 %v1046
      %v1048 = vpop.xlane.xlu0 %1047
      %v1049 = vcvt.f32.s32 %v1048
      %v1050 = vcvt.f32.s32 %v1044
      %v1051 = vshll.u32 %v1050, 16
      %v1052 = vadd.s32 %v1051, %v1049
      %v1053 = vsel %vm631, %v937, 2147483647
      %v1054 = vand.u32 %v1053, 65535
      %v1055 = vshra.s32 %v1053, 16
      %v1056 = vcvt.s32.f32 %v1054
      %v1057 = vcvt.s32.f32 %v1055
      %1058 = vmin.xlane.f32.xlu0 %v1057
      %v1059 = vpop.xlane.xlu0 %1058
      %vm1060 = vcmp.eq.f32.partialorder %v1057, %v1059
      %v1061 = vsel %vm1060, %v1056, inf
      %1062 = vmin.xlane.f32.xlu0 %v1061
      %v1063 = vpop.xlane.xlu0 %1062
      %v1064 = vcvt.f32.s32 %v1063
      %v1065 = vcvt.f32.s32 %v1059
      %v1066 = vshll.u32 %v1065, 16
      %v1067 = vadd.s32 %v1066, %v1064
      %v1068 = vsel %vm631, %v938, 2147483647
      %v1069 = vand.u32 %v1068, 65535
      %v1070 = vshra.s32 %v1068, 16
      %v1071 = vcvt.s32.f32 %v1069
      %v1072 = vcvt.s32.f32 %v1070
      %1073 = vmin.xlane.f32.xlu0 %v1072
      %v1074 = vpop.xlane.xlu0 %1073
      %vm1075 = vcmp.eq.f32.partialorder %v1072, %v1074
      %v1076 = vsel %vm1075, %v1071, inf
      %1077 = vmin.xlane.f32.xlu0 %v1076
      %v1078 = vpop.xlane.xlu0 %1077
      %v1079 = vcvt.f32.s32 %v1078
      %v1080 = vcvt.f32.s32 %v1074
      %v1081 = vshll.u32 %v1080, 16
      %v1082 = vadd.s32 %v1081, %v1079
      %v1083 = vsel %vm631, %v939, 2147483647
      %v1084 = vand.u32 %v1083, 65535
      %v1085 = vshra.s32 %v1083, 16
      %v1086 = vcvt.s32.f32 %v1084
      %v1087 = vcvt.s32.f32 %v1085
      %1088 = vmin.xlane.f32.xlu0 %v1087
      %v1089 = vpop.xlane.xlu0 %1088
      %vm1090 = vcmp.eq.f32.partialorder %v1087, %v1089
      %v1091 = vsel %vm1090, %v1086, inf
      %1092 = vmin.xlane.f32.xlu0 %v1091
      %v1093 = vpop.xlane.xlu0 %1092
      %v1094 = vcvt.f32.s32 %v1093
      %v1095 = vcvt.f32.s32 %v1089
      %v1096 = vshll.u32 %v1095, 16
      %v1097 = vadd.s32 %v1096, %v1094
      %v1098 = vsel %vm631, %v940, 2147483647
      %v1099 = vand.u32 %v1098, 65535
      %v1100 = vshra.s32 %v1098, 16
      %v1101 = vcvt.s32.f32 %v1099
      %v1102 = vcvt.s32.f32 %v1100
      %1103 = vmin.xlane.f32.xlu0 %v1102
      %v1104 = vpop.xlane.xlu0 %1103
      %vm1105 = vcmp.eq.f32.partialorder %v1102, %v1104
      %v1106 = vsel %vm1105, %v1101, inf
      %1107 = vmin.xlane.f32.xlu0 %v1106
      %v1108 = vpop.xlane.xlu0 %1107
      %v1109 = vcvt.f32.s32 %v1108
      %v1110 = vcvt.f32.s32 %v1104
      %v1111 = vshll.u32 %v1110, 16
      %v1112 = vadd.s32 %v1111, %v1109
      %v1113 = vsel %vm631, %v941, 2147483647
      %v1114 = vand.u32 %v1113, 65535
      %v1115 = vshra.s32 %v1113, 16
      %v1116 = vcvt.s32.f32 %v1114
      %v1117 = vcvt.s32.f32 %v1115
      %1118 = vmin.xlane.f32.xlu0 %v1117
      %v1119 = vpop.xlane.xlu0 %1118
      %vm1120 = vcmp.eq.f32.partialorder %v1117, %v1119
      %v1121 = vsel %vm1120, %v1116, inf
      %1122 = vmin.xlane.f32.xlu0 %v1121
      %v1123 = vpop.xlane.xlu0 %1122
      %v1124 = vcvt.f32.s32 %v1123
      %v1125 = vcvt.f32.s32 %v1119
      %v1126 = vshll.u32 %v1125, 16
      %v1127 = vadd.s32 %v1126, %v1124
      %v1128 = vsel %vm631, %v942, 2147483647
      %v1129 = vand.u32 %v1128, 65535
      %v1130 = vshra.s32 %v1128, 16
      %v1131 = vcvt.s32.f32 %v1129
      %v1132 = vcvt.s32.f32 %v1130
      %1133 = vmin.xlane.f32.xlu0 %v1132
      %v1134 = vpop.xlane.xlu0 %1133
      %vm1135 = vcmp.eq.f32.partialorder %v1132, %v1134
      %v1136 = vsel %vm1135, %v1131, inf
      %1137 = vmin.xlane.f32.xlu0 %v1136
      %v1138 = vpop.xlane.xlu0 %1137
      %v1139 = vcvt.f32.s32 %v1138
      %v1140 = vcvt.f32.s32 %v1134
      %v1141 = vshll.u32 %v1140, 16
      %v1142 = vadd.s32 %v1141, %v1139
      %v1143 = vsel %vm631, %v943, 2147483647
      %v1144 = vand.u32 %v1143, 65535
      %v1145 = vshra.s32 %v1143, 16
      %v1146 = vcvt.s32.f32 %v1144
      %v1147 = vcvt.s32.f32 %v1145
      %1148 = vmin.xlane.f32.xlu0 %v1147
      %v1149 = vpop.xlane.xlu0 %1148
      %vm1150 = vcmp.eq.f32.partialorder %v1147, %v1149
      %v1151 = vsel %vm1150, %v1146, inf
      %1152 = vmin.xlane.f32.xlu0 %v1151
      %v1153 = vpop.xlane.xlu0 %1152
      %v1154 = vcvt.f32.s32 %v1153
      %v1155 = vcvt.f32.s32 %v1149
      %v1156 = vshll.u32 %v1155, 16
      %v1157 = vadd.s32 %v1156, %v1154
      %v1158 = vsel %vm631, %v944, 2147483647
      %v1159 = vand.u32 %v1158, 65535
      %v1160 = vshra.s32 %v1158, 16
      %v1161 = vcvt.s32.f32 %v1159
      %v1162 = vcvt.s32.f32 %v1160
      %1163 = vmin.xlane.f32.xlu0 %v1162
      %v1164 = vpop.xlane.xlu0 %1163
      %vm1165 = vcmp.eq.f32.partialorder %v1162, %v1164
      %v1166 = vsel %vm1165, %v1161, inf
      %1167 = vmin.xlane.f32.xlu0 %v1166
      %v1168 = vpop.xlane.xlu0 %1167
      %v1169 = vcvt.f32.s32 %v1168
      %v1170 = vcvt.f32.s32 %v1164
      %v1171 = vshll.u32 %v1170, 16
      %v1172 = vadd.s32 %v1171, %v1169
      %v1173 = vsel %vm631, %v945, 2147483647
      %v1174 = vand.u32 %v1173, 65535
      %v1175 = vshra.s32 %v1173, 16
      %v1176 = vcvt.s32.f32 %v1174
      %v1177 = vcvt.s32.f32 %v1175
      %1178 = vmin.xlane.f32.xlu0 %v1177
      %v1179 = vpop.xlane.xlu0 %1178
      %vm1180 = vcmp.eq.f32.partialorder %v1177, %v1179
      %v1181 = vsel %vm1180, %v1176, inf
      %1182 = vmin.xlane.f32.xlu0 %v1181
      %v1183 = vpop.xlane.xlu0 %1182
      %v1184 = vcvt.f32.s32 %v1183
      %v1185 = vcvt.f32.s32 %v1179
      %v1186 = vshll.u32 %v1185, 16
      %v1187 = vadd.s32 %v1186, %v1184
      %v1188 = vsel %vm631, %v946, 2147483647
      %v1189 = vand.u32 %v1188, 65535
      %v1190 = vshra.s32 %v1188, 16
      %v1191 = vcvt.s32.f32 %v1189
      %v1192 = vcvt.s32.f32 %v1190
      %1193 = vmin.xlane.f32.xlu0 %v1192
      %v1194 = vpop.xlane.xlu0 %1193
      %vm1195 = vcmp.eq.f32.partialorder %v1192, %v1194
      %v1196 = vsel %vm1195, %v1191, inf
      %1197 = vmin.xlane.f32.xlu0 %v1196
      %v1198 = vpop.xlane.xlu0 %1197
      %v1199 = vcvt.f32.s32 %v1198
      %v1200 = vcvt.f32.s32 %v1194
      %v1201 = vshll.u32 %v1200, 16
      %v1202 = vadd.s32 %v1201, %v1199
      %v1203 = vsel %vm631, %v947, 2147483647
      %v1204 = vand.u32 %v1203, 65535
      %v1205 = vshra.s32 %v1203, 16
      %v1206 = vcvt.s32.f32 %v1204
      %v1207 = vcvt.s32.f32 %v1205
      %1208 = vmin.xlane.f32.xlu0 %v1207
      %v1209 = vpop.xlane.xlu0 %1208
      %vm1210 = vcmp.eq.f32.partialorder %v1207, %v1209
      %v1211 = vsel %vm1210, %v1206, inf
      %1212 = vmin.xlane.f32.xlu0 %v1211
      %v1213 = vpop.xlane.xlu0 %1212
      %v1214 = vcvt.f32.s32 %v1213
      %v1215 = vcvt.f32.s32 %v1209
      %v1216 = vshll.u32 %v1215, 16
      %v1217 = vadd.s32 %v1216, %v1214
      %v1218 = vsel %vm631, %v948, 2147483647
      %v1219 = vand.u32 %v1218, 65535
      %v1220 = vshra.s32 %v1218, 16
      %v1221 = vcvt.s32.f32 %v1219
      %v1222 = vcvt.s32.f32 %v1220
      %1223 = vmin.xlane.f32.xlu0 %v1222
      %v1224 = vpop.xlane.xlu0 %1223
      %vm1225 = vcmp.eq.f32.partialorder %v1222, %v1224
      %v1226 = vsel %vm1225, %v1221, inf
      %1227 = vmin.xlane.f32.xlu0 %v1226
      %v1228 = vpop.xlane.xlu0 %1227
      %v1229 = vcvt.f32.s32 %v1228
      %v1230 = vcvt.f32.s32 %v1224
      %v1231 = vshll.u32 %v1230, 16
      %v1232 = vadd.s32 %v1231, %v1229
      %v1233 = vsel %vm631, %v949, 2147483647
      %v1234 = vand.u32 %v1233, 65535
      %v1235 = vshra.s32 %v1233, 16
      %v1236 = vcvt.s32.f32 %v1234
      %v1237 = vcvt.s32.f32 %v1235
      %1238 = vmin.xlane.f32.xlu0 %v1237
      %v1239 = vpop.xlane.xlu0 %1238
      %vm1240 = vcmp.eq.f32.partialorder %v1237, %v1239
      %v1241 = vsel %vm1240, %v1236, inf
      %1242 = vmin.xlane.f32.xlu0 %v1241
      %v1243 = vpop.xlane.xlu0 %1242
      %v1244 = vcvt.f32.s32 %v1243
      %v1245 = vcvt.f32.s32 %v1239
      %v1246 = vshll.u32 %v1245, 16
      %v1247 = vadd.s32 %v1246, %v1244
      %v1248 = vsel %vm631, %v950, 2147483647
      %v1249 = vand.u32 %v1248, 65535
      %v1250 = vshra.s32 %v1248, 16
      %v1251 = vcvt.s32.f32 %v1249
      %v1252 = vcvt.s32.f32 %v1250
      %1253 = vmin.xlane.f32.xlu0 %v1252
      %v1254 = vpop.xlane.xlu0 %1253
      %vm1255 = vcmp.eq.f32.partialorder %v1252, %v1254
      %v1256 = vsel %vm1255, %v1251, inf
      %1257 = vmin.xlane.f32.xlu0 %v1256
      %v1258 = vpop.xlane.xlu0 %1257
      %v1259 = vcvt.f32.s32 %v1258
      %v1260 = vcvt.f32.s32 %v1254
      %v1261 = vshll.u32 %v1260, 16
      %v1262 = vadd.s32 %v1261, %v1259
      %v1263 = vsel %vm631, %v951, 2147483647
      %v1264 = vand.u32 %v1263, 65535
      %v1265 = vshra.s32 %v1263, 16
      %v1266 = vcvt.s32.f32 %v1264
      %v1267 = vcvt.s32.f32 %v1265
      %1268 = vmin.xlane.f32.xlu0 %v1267
      %v1269 = vpop.xlane.xlu0 %1268
      %vm1270 = vcmp.eq.f32.partialorder %v1267, %v1269
      %v1271 = vsel %vm1270, %v1266, inf
      %1272 = vmin.xlane.f32.xlu0 %v1271
      %v1273 = vpop.xlane.xlu0 %1272
      %v1274 = vcvt.f32.s32 %v1273
      %v1275 = vcvt.f32.s32 %v1269
      %v1276 = vshll.u32 %v1275, 16
      %v1277 = vadd.s32 %v1276, %v1274
      %v1278 = vsel %vm631, %v952, 2147483647
      %v1279 = vand.u32 %v1278, 65535
      %v1280 = vshra.s32 %v1278, 16
      %v1281 = vcvt.s32.f32 %v1279
      %v1282 = vcvt.s32.f32 %v1280
      %1283 = vmin.xlane.f32.xlu0 %v1282
      %v1284 = vpop.xlane.xlu0 %1283
      %vm1285 = vcmp.eq.f32.partialorder %v1282, %v1284
      %v1286 = vsel %vm1285, %v1281, inf
      %1287 = vmin.xlane.f32.xlu0 %v1286
      %v1288 = vpop.xlane.xlu0 %1287
      %v1289 = vcvt.f32.s32 %v1288
      %v1290 = vcvt.f32.s32 %v1284
      %v1291 = vshll.u32 %v1290, 16
      %v1292 = vadd.s32 %v1291, %v1289
      %v1293 = vsel %vm631, %v953, 2147483647
      %v1294 = vand.u32 %v1293, 65535
      %v1295 = vshra.s32 %v1293, 16
      %v1296 = vcvt.s32.f32 %v1294
      %v1297 = vcvt.s32.f32 %v1295
      %1298 = vmin.xlane.f32.xlu0 %v1297
      %v1299 = vpop.xlane.xlu0 %1298
      %vm1300 = vcmp.eq.f32.partialorder %v1297, %v1299
      %v1301 = vsel %vm1300, %v1296, inf
      %1302 = vmin.xlane.f32.xlu0 %v1301
      %v1303 = vpop.xlane.xlu0 %1302
      %v1304 = vcvt.f32.s32 %v1303
      %v1305 = vcvt.f32.s32 %v1299
      %v1306 = vshll.u32 %v1305, 16
      %v1307 = vadd.s32 %v1306, %v1304
      %v1308 = vsel %vm631, %v954, 2147483647
      %v1309 = vand.u32 %v1308, 65535
      %v1310 = vshra.s32 %v1308, 16
      %v1311 = vcvt.s32.f32 %v1309
      %v1312 = vcvt.s32.f32 %v1310
      %1313 = vmin.xlane.f32.xlu0 %v1312
      %v1314 = vpop.xlane.xlu0 %1313
      %vm1315 = vcmp.eq.f32.partialorder %v1312, %v1314
      %v1316 = vsel %vm1315, %v1311, inf
      %1317 = vmin.xlane.f32.xlu0 %v1316
      %v1318 = vpop.xlane.xlu0 %1317
      %v1319 = vcvt.f32.s32 %v1318
      %v1320 = vcvt.f32.s32 %v1314
      %v1321 = vshll.u32 %v1320, 16
      %v1322 = vadd.s32 %v1321, %v1319
      %v1323 = vsel %vm631, %v955, 2147483647
      %v1324 = vand.u32 %v1323, 65535
      %v1325 = vshra.s32 %v1323, 16
      %v1326 = vcvt.s32.f32 %v1324
      %v1327 = vcvt.s32.f32 %v1325
      %1328 = vmin.xlane.f32.xlu0 %v1327
      %v1329 = vpop.xlane.xlu0 %1328
      %vm1330 = vcmp.eq.f32.partialorder %v1327, %v1329
      %v1331 = vsel %vm1330, %v1326, inf
      %1332 = vmin.xlane.f32.xlu0 %v1331
      %v1333 = vpop.xlane.xlu0 %1332
      %v1334 = vcvt.f32.s32 %v1333
      %v1335 = vcvt.f32.s32 %v1329
      %v1336 = vshll.u32 %v1335, 16
      %v1337 = vadd.s32 %v1336, %v1334
      %v1338 = vsel %vm631, %v956, 2147483647
      %v1339 = vand.u32 %v1338, 65535
      %v1340 = vshra.s32 %v1338, 16
      %v1341 = vcvt.s32.f32 %v1339
      %v1342 = vcvt.s32.f32 %v1340
      %1343 = vmin.xlane.f32.xlu0 %v1342
      %v1344 = vpop.xlane.xlu0 %1343
      %vm1345 = vcmp.eq.f32.partialorder %v1342, %v1344
      %v1346 = vsel %vm1345, %v1341, inf
      %1347 = vmin.xlane.f32.xlu0 %v1346
      %v1348 = vpop.xlane.xlu0 %1347
      %v1349 = vcvt.f32.s32 %v1348
      %v1350 = vcvt.f32.s32 %v1344
      %v1351 = vshll.u32 %v1350, 16
      %v1352 = vadd.s32 %v1351, %v1349
      %v1353 = vsel %vm631, %v957, 2147483647
      %v1354 = vand.u32 %v1353, 65535
      %v1355 = vshra.s32 %v1353, 16
      %v1356 = vcvt.s32.f32 %v1354
      %v1357 = vcvt.s32.f32 %v1355
      %1358 = vmin.xlane.f32.xlu0 %v1357
      %v1359 = vpop.xlane.xlu0 %1358
      %vm1360 = vcmp.eq.f32.partialorder %v1357, %v1359
      %v1361 = vsel %vm1360, %v1356, inf
      %1362 = vmin.xlane.f32.xlu0 %v1361
      %v1363 = vpop.xlane.xlu0 %1362
      %v1364 = vcvt.f32.s32 %v1363
      %v1365 = vcvt.f32.s32 %v1359
      %v1366 = vshll.u32 %v1365, 16
      %v1367 = vadd.s32 %v1366, %v1364
      %v1368 = vsel %vm631, %v958, 2147483647
      %v1369 = vand.u32 %v1368, 65535
      %v1370 = vshra.s32 %v1368, 16
      %v1371 = vcvt.s32.f32 %v1369
      %v1372 = vcvt.s32.f32 %v1370
      %1373 = vmin.xlane.f32.xlu0 %v1372
      %v1374 = vpop.xlane.xlu0 %1373
      %vm1375 = vcmp.eq.f32.partialorder %v1372, %v1374
      %v1376 = vsel %vm1375, %v1371, inf
      %1377 = vmin.xlane.f32.xlu0 %v1376
      %v1378 = vpop.xlane.xlu0 %1377
      %v1379 = vcvt.f32.s32 %v1378
      %v1380 = vcvt.f32.s32 %v1374
      %v1381 = vshll.u32 %v1380, 16
      %v1382 = vadd.s32 %v1381, %v1379
      %v1383 = vsel %vm631, %v959, 2147483647
      %v1384 = vand.u32 %v1383, 65535
      %v1385 = vshra.s32 %v1383, 16
      %v1386 = vcvt.s32.f32 %v1384
      %v1387 = vcvt.s32.f32 %v1385
      %1388 = vmin.xlane.f32.xlu0 %v1387
      %v1389 = vpop.xlane.xlu0 %1388
      %vm1390 = vcmp.eq.f32.partialorder %v1387, %v1389
      %v1391 = vsel %vm1390, %v1386, inf
      %1392 = vmin.xlane.f32.xlu0 %v1391
      %v1393 = vpop.xlane.xlu0 %1392
      %v1394 = vcvt.f32.s32 %v1393
      %v1395 = vcvt.f32.s32 %v1389
      %v1396 = vshll.u32 %v1395, 16
      %v1397 = vadd.s32 %v1396, %v1394
      %v1398 = vsel %vm631, %v960, 2147483647
      %v1399 = vand.u32 %v1398, 65535
      %v1400 = vshra.s32 %v1398, 16
      %v1401 = vcvt.s32.f32 %v1399
      %v1402 = vcvt.s32.f32 %v1400
      %1403 = vmin.xlane.f32.xlu0 %v1402
      %v1404 = vpop.xlane.xlu0 %1403
      %vm1405 = vcmp.eq.f32.partialorder %v1402, %v1404
      %v1406 = vsel %vm1405, %v1401, inf
      %1407 = vmin.xlane.f32.xlu0 %v1406
      %v1408 = vpop.xlane.xlu0 %1407
      %v1409 = vcvt.f32.s32 %v1408
      %v1410 = vcvt.f32.s32 %v1404
      %v1411 = vshll.u32 %v1410, 16
      %v1412 = vadd.s32 %v1411, %v1409
      %v1413 = vsel %vm631, %v961, 2147483647
      %v1414 = vand.u32 %v1413, 65535
      %v1415 = vshra.s32 %v1413, 16
      %v1416 = vcvt.s32.f32 %v1414
      %v1417 = vcvt.s32.f32 %v1415
      %1418 = vmin.xlane.f32.xlu0 %v1417
      %v1419 = vpop.xlane.xlu0 %1418
      %vm1420 = vcmp.eq.f32.partialorder %v1417, %v1419
      %v1421 = vsel %vm1420, %v1416, inf
      %1422 = vmin.xlane.f32.xlu0 %v1421
      %v1423 = vpop.xlane.xlu0 %1422
      %v1424 = vcvt.f32.s32 %v1423
      %v1425 = vcvt.f32.s32 %v1419
      %v1426 = vshll.u32 %v1425, 16
      %v1427 = vadd.s32 %v1426, %v1424
      %v1428 = vsel %vm631, %v962, 2147483647
      %v1429 = vand.u32 %v1428, 65535
      %v1430 = vshra.s32 %v1428, 16
      %v1431 = vcvt.s32.f32 %v1429
      %v1432 = vcvt.s32.f32 %v1430
      %1433 = vmin.xlane.f32.xlu0 %v1432
      %v1434 = vpop.xlane.xlu0 %1433
      %vm1435 = vcmp.eq.f32.partialorder %v1432, %v1434
      %v1436 = vsel %vm1435, %v1431, inf
      %1437 = vmin.xlane.f32.xlu0 %v1436
      %v1438 = vpop.xlane.xlu0 %1437
      %v1439 = vcvt.f32.s32 %v1438
      %v1440 = vcvt.f32.s32 %v1434
      %v1441 = vshll.u32 %v1440, 16
      %v1442 = vadd.s32 %v1441, %v1439
      %vm1443 = vcmask 7168
      %1444 = vst.msk [vmem:[%s407] sm:$0xff] %vm1443, %v803
      %1445 = vst.msk [vmem:[%s407 + $0x8] sm:$0xff] %vm1443, %v806
      %1446 = vst.msk [vmem:[%s407 + $0x10] sm:$0xff] %vm1443, %v809
      %1447 = vst.msk [vmem:[%s407 + $0x18] sm:$0xff] %vm1443, %v812
      %1448 = vst.msk [vmem:[%s407 + $0x20] sm:$0xff] %vm1443, %v815
      %1449 = vst.msk [vmem:[%s407 + $0x28] sm:$0xff] %vm1443, %v818
      %1450 = vst.msk [vmem:[%s407 + $0x30] sm:$0xff] %vm1443, %v821
      %1451 = vst.msk [vmem:[%s407 + $0x38] sm:$0xff] %vm1443, %v824
      %1452 = vst.msk [vmem:[%s407 + $0x40] sm:$0xff] %vm1443, %v827
      %1453 = vst.msk [vmem:[%s407 + $0x48] sm:$0xff] %vm1443, %v830
      %1454 = vst.msk [vmem:[%s407 + $0x50] sm:$0xff] %vm1443, %v833
      %1455 = vst.msk [vmem:[%s407 + $0x58] sm:$0xff] %vm1443, %v836
      %1456 = vst.msk [vmem:[%s407 + $0x60] sm:$0xff] %vm1443, %v839
      %1457 = vst.msk [vmem:[%s407 + $0x68] sm:$0xff] %vm1443, %v842
      %1458 = vst.msk [vmem:[%s407 + $0x70] sm:$0xff] %vm1443, %v845
      %1459 = vst.msk [vmem:[%s407 + $0x78] sm:$0xff] %vm1443, %v848
      %1460 = vst.msk [vmem:[%s407 + $0x80] sm:$0xff] %vm1443, %v851
      %1461 = vst.msk [vmem:[%s407 + $0x88] sm:$0xff] %vm1443, %v854
      %1462 = vst.msk [vmem:[%s407 + $0x90] sm:$0xff] %vm1443, %v857
      %1463 = vst.msk [vmem:[%s407 + $0x98] sm:$0xff] %vm1443, %v860
      %1464 = vst.msk [vmem:[%s407 + $0xa0] sm:$0xff] %vm1443, %v863
      %1465 = vst.msk [vmem:[%s407 + $0xa8] sm:$0xff] %vm1443, %v866
      %1466 = vst.msk [vmem:[%s407 + $0xb0] sm:$0xff] %vm1443, %v869
      %1467 = vst.msk [vmem:[%s407 + $0xb8] sm:$0xff] %vm1443, %v872
      %1468 = vst.msk [vmem:[%s407 + $0xc0] sm:$0xff] %vm1443, %v875
      %1469 = vst.msk [vmem:[%s407 + $0xc8] sm:$0xff] %vm1443, %v878
      %1470 = vst.msk [vmem:[%s407 + $0xd0] sm:$0xff] %vm1443, %v881
      %1471 = vst.msk [vmem:[%s407 + $0xd8] sm:$0xff] %vm1443, %v884
      %1472 = vst.msk [vmem:[%s407 + $0xe0] sm:$0xff] %vm1443, %v887
      %1473 = vst.msk [vmem:[%s407 + $0xe8] sm:$0xff] %vm1443, %v890
      %1474 = vst.msk [vmem:[%s407 + $0xf0] sm:$0xff] %vm1443, %v893
      %1475 = vst.msk [vmem:[%s407 + $0xf8] sm:$0xff] %vm1443, %v896
      %1476 = vst.msk [vmem:[%s417] sm:$0xff] %vm1443, %v977
      %1477 = vst.msk [vmem:[%s417 + $0x8] sm:$0xff] %vm1443, %v992
      %1478 = vst.msk [vmem:[%s417 + $0x10] sm:$0xff] %vm1443, %v1007
      %1479 = vst.msk [vmem:[%s417 + $0x18] sm:$0xff] %vm1443, %v1022
      %1480 = vst.msk [vmem:[%s417 + $0x20] sm:$0xff] %vm1443, %v1037
      %1481 = vst.msk [vmem:[%s417 + $0x28] sm:$0xff] %vm1443, %v1052
      %1482 = vst.msk [vmem:[%s417 + $0x30] sm:$0xff] %vm1443, %v1067
      %1483 = vst.msk [vmem:[%s417 + $0x38] sm:$0xff] %vm1443, %v1082
      %1484 = vst.msk [vmem:[%s417 + $0x40] sm:$0xff] %vm1443, %v1097
      %1485 = vst.msk [vmem:[%s417 + $0x48] sm:$0xff] %vm1443, %v1112
      %1486 = vst.msk [vmem:[%s417 + $0x50] sm:$0xff] %vm1443, %v1127
      %1487 = vst.msk [vmem:[%s417 + $0x58] sm:$0xff] %vm1443, %v1142
      %1488 = vst.msk [vmem:[%s417 + $0x60] sm:$0xff] %vm1443, %v1157
      %1489 = vst.msk [vmem:[%s417 + $0x68] sm:$0xff] %vm1443, %v1172
      %1490 = vst.msk [vmem:[%s417 + $0x70] sm:$0xff] %vm1443, %v1187
      %1491 = vst.msk [vmem:[%s417 + $0x78] sm:$0xff] %vm1443, %v1202
      %1492 = vst.msk [vmem:[%s417 + $0x80] sm:$0xff] %vm1443, %v1217
      %1493 = vst.msk [vmem:[%s417 + $0x88] sm:$0xff] %vm1443, %v1232
      %1494 = vst.msk [vmem:[%s417 + $0x90] sm:$0xff] %vm1443, %v1247
      %1495 = vst.msk [vmem:[%s417 + $0x98] sm:$0xff] %vm1443, %v1262
      %1496 = vst.msk [vmem:[%s417 + $0xa0] sm:$0xff] %vm1443, %v1277
      %1497 = vst.msk [vmem:[%s417 + $0xa8] sm:$0xff] %vm1443, %v1292
      %1498 = vst.msk [vmem:[%s417 + $0xb0] sm:$0xff] %vm1443, %v1307
      %1499 = vst.msk [vmem:[%s417 + $0xb8] sm:$0xff] %vm1443, %v1322
      %1500 = vst.msk [vmem:[%s417 + $0xc0] sm:$0xff] %vm1443, %v1337
      %1501 = vst.msk [vmem:[%s417 + $0xc8] sm:$0xff] %vm1443, %v1352
      %1502 = vst.msk [vmem:[%s417 + $0xd0] sm:$0xff] %vm1443, %v1367
      %1503 = vst.msk [vmem:[%s417 + $0xd8] sm:$0xff] %vm1443, %v1382
      %1504 = vst.msk [vmem:[%s417 + $0xe0] sm:$0xff] %vm1443, %v1397
      %1505 = vst.msk [vmem:[%s417 + $0xe8] sm:$0xff] %vm1443, %v1412
      %1506 = vst.msk [vmem:[%s417 + $0xf0] sm:$0xff] %vm1443, %v1427
      %1507 = vst.msk [vmem:[%s417 + $0xf8] sm:$0xff] %vm1443, %v1442
      %s1508 = smul.u32 32, %s26
      %p1509 = scmp.lt.s32.totalorder %s25, 1
      %s1510 = scalar_select %p1509, %s25, 1
      %p1511 = scmp.lt.s32.totalorder %s1508, 31
      %s1512 = scalar_select %p1511, %s1508, 31
      %s1513 = smul.addr %s1510, 32
      %s1514 = sadd.s32 %s1512, %s1513
      %s1515 = smul.addr %s1514, 8
      %s1516 = scalar_lea.vmem %s7, %s1515
      %s1517 = smul.u32 32, %s26
      %p1518 = scmp.lt.s32.totalorder %s25, 1
      %s1519 = scalar_select %p1518, %s25, 1
      %p1520 = scmp.lt.s32.totalorder %s1517, 31
      %s1521 = scalar_select %p1520, %s1517, 31
      %s1522 = smul.addr %s1519, 32
      %s1523 = sadd.s32 %s1521, %s1522
      %s1524 = smul.addr %s1523, 8
      %s1525 = scalar_lea.vmem %s8, %s1524
      %s1526 = smul.u32 32, %s26
      %p1527 = scmp.lt.s32.totalorder %s25, 1
      %s1528 = scalar_select %p1527, %s25, 1
      %p1529 = scmp.lt.s32.totalorder %s1526, 31
      %s1530 = scalar_select %p1529, %s1526, 31
      %s1531 = smul.addr %s1528, 32
      %s1532 = sadd.s32 %s1530, %s1531
      %s1533 = smul.addr %s1532, 8
      %s1534 = scalar_lea.vmem %s9, %s1533
      // Predicated region
      $region49: #{approachnet_forward.3} parent=47 // pred_check
        %p1535 = pneg %p207
      $region50: #{approachnet_forward.3} parent=47 // pred_check_branch
        %1537 = sbr.rel (%p1535) target = $region52
      $region51: #{approachnet_forward.3} parent=47 // pred_region
        %s1538 = smul.u32 32, %s26
      $region52: #{approachnet_forward.3} parent=47 // pred_fallthru
        _
      // Predicated region
      $region53: #{approachnet_forward.3} parent=47 // pred_check
        %p1539 = pneg %p235
      $region54: #{approachnet_forward.3} parent=47 // pred_check_branch
        %1541 = sbr.rel (%p1539) target = $region56
      $region55: #{approachnet_forward.3} parent=47 // pred_region
        %s1542 = smul.u32 32, %s26
      $region56: #{approachnet_forward.3} parent=47 // pred_fallthru
        _
      // Predicated region
      $region57: #{approachnet_forward.3} parent=47 // pred_check
        %p1543 = pneg %p263
      $region58: #{approachnet_forward.3} parent=47 // pred_check_branch
        %1545 = sbr.rel (%p1543) target = $region60
      $region59: #{approachnet_forward.3} parent=47 // pred_region
        %s1546 = smul.u32 32, %s26
      $region60: #{approachnet_forward.3} parent=47 // pred_fallthru
        _
    $region48: #{approachnet_forward.3} parent=5 // pred_fallthru
      _
    %p1547 = scmp.le.s32.totalorder 2, %s16
    // Predicated region
    $region61: #{approachnet_forward.3} parent=5 // pred_check
      %p1548 = pneg %p1547
    $region62: #{approachnet_forward.3} parent=5 // pred_check_branch
      %1550 = sbr.rel (%p1548) target = $region64
    $region63: #{approachnet_forward.3} parent=5 // pred_region
      %s1551 = ssub.s32 %s16, 2
      // Predicated region
      $region65: #{approachnet_forward.3} parent=63 // pred_check
        %p1552 = pneg %p213
      $region66: #{approachnet_forward.3} parent=63 // pred_check_branch
        %1554 = sbr.rel (%p1552) target = $region68
      $region67: #{approachnet_forward.3} parent=63 // pred_region
        %s1555 = smul.u32 32, %s28
        %p1556 = scmp.lt.s32.totalorder %s27, 1
        %s1557 = scalar_select %p1556, %s27, 1
        %p1558 = scmp.lt.s32.totalorder %s1555, 31
        %s1559 = scalar_select %p1558, %s1555, 31
        %s1560 = smul.addr %s1557, 32
        %s1561 = sadd.s32 %s1559, %s1560
        %s1562 = smul.addr %s1561, 8
        %s1563 = scalar_lea.vmem %s7, %s1562
      $region68: #{approachnet_forward.3} parent=63 // pred_fallthru
        _
      // Predicated region
      $region69: #{approachnet_forward.3} parent=63 // pred_check
        %p1564 = pneg %p241
      $region70: #{approachnet_forward.3} parent=63 // pred_check_branch
        %1566 = sbr.rel (%p1564) target = $region72
      $region71: #{approachnet_forward.3} parent=63 // pred_region
        %s1567 = smul.u32 32, %s28
        %p1568 = scmp.lt.s32.totalorder %s27, 1
        %s1569 = scalar_select %p1568, %s27, 1
        %p1570 = scmp.lt.s32.totalorder %s1567, 31
        %s1571 = scalar_select %p1570, %s1567, 31
        %s1572 = smul.addr %s1569, 32
        %s1573 = sadd.s32 %s1571, %s1572
        %s1574 = smul.addr %s1573, 8
        %s1575 = scalar_lea.vmem %s8, %s1574
      $region72: #{approachnet_forward.3} parent=63 // pred_fallthru
        _
      // Predicated region
      $region73: #{approachnet_forward.3} parent=63 // pred_check
        %p1576 = pneg %p269
      $region74: #{approachnet_forward.3} parent=63 // pred_check_branch
        %1578 = sbr.rel (%p1576) target = $region76
      $region75: #{approachnet_forward.3} parent=63 // pred_region
        %s1579 = smul.u32 32, %s28
        %p1580 = scmp.lt.s32.totalorder %s27, 1
        %s1581 = scalar_select %p1580, %s27, 1
        %p1582 = scmp.lt.s32.totalorder %s1579, 31
        %s1583 = scalar_select %p1582, %s1579, 31
        %s1584 = smul.addr %s1581, 32
        %s1585 = sadd.s32 %s1583, %s1584
        %s1586 = smul.addr %s1585, 8
        %s1587 = scalar_lea.vmem %s9, %s1586
      $region76: #{approachnet_forward.3} parent=63 // pred_fallthru
        _
    $region64: #{approachnet_forward.3} parent=5 // pred_fallthru
      _
  $region6: #{approachnet_forward.3} parent=0 // loop_footer
    %s20 = sadd.s32 1, %s16
  $region7: #{approachnet_forward.3} parent=0 // loop_footer_branch
    %15 = sbr.rel target = $region3
  $region8: #{approachnet_forward.3} parent=0 // loop_exit
    _

</llo_original>
